<compile_context>
chip_gen: v7x
topology: tpu7x:2x2x1
jax: 0.10.0
libtpu: 0.0.40
codegen_flags: <defaults>
</compile_context>

<pallas_src>
import jax
import jax.numpy as jnp
from jax.experimental import pallas as pl
from jax.experimental.pallas import tpu as pltpu

# ---- model hyper-parameters (AE_LATENT_SPACE_SIZE assumed = 32) -------------
AE_LATENT_SPACE_SIZE = 32
D_IN = 256      # flattened input feature size
HIDDEN = 128    # encoder/decoder hidden width
LAT_PAD = 128   # lane-dense latent slab width (latent zero-padded to 128 lanes)
MAX_TM = 1024   # cap on the batch tile
BATCH = 512     # example batch


def _ae_kernel(x_ref,
               w1_ref, b1_ref,   # encoder layer 1: D_IN -> HIDDEN     (bf16 / f32)
               w2_ref, b2_ref,   # encoder layer 2: HIDDEN -> LAT_PAD  (bf16 / f32)
               w3_ref, b3_ref,   # decoder layer 1: LAT_PAD -> HIDDEN  (bf16 / f32)
               w4_ref, b4_ref,   # decoder layer 2: HIDDEN -> D_IN     (bf16 / f32)
               lat_ref, rec_ref):
    # x arrives f32 straight from HBM (no wrapper-side cast) -> cast on the VPU.
    x = x_ref[...].astype(jnp.bfloat16)                              # (TM, D_IN)

    # --- encoder ---
    h1 = jnp.dot(x, w1_ref[...], preferred_element_type=jnp.float32) + b1_ref[...]
    h1 = jnp.maximum(h1, 0.0).astype(jnp.bfloat16)                   # ReLU, bf16 for MXU

    # lanes [LATENT:128] of w2/b2 are zero-padded -> z[:, LATENT:] == 0 exactly
    z = jnp.dot(h1, w2_ref[...], preferred_element_type=jnp.float32) + b2_ref[...]
    lat_ref[...] = z.astype(lat_ref.dtype)                           # lane-dense bf16 store

    # --- decoder --- (padded rows of w3 are zero, so padded lanes contribute 0)
    zb = z.astype(jnp.bfloat16)
    h2 = jnp.dot(zb, w3_ref[...], preferred_element_type=jnp.float32) + b3_ref[...]
    h2 = jnp.maximum(h2, 0.0).astype(jnp.bfloat16)                   # ReLU

    y = jnp.dot(h2, w4_ref[...], preferred_element_type=jnp.float32) + b4_ref[...]
    rec_ref[...] = jax.nn.sigmoid(y).astype(rec_ref.dtype)           # bf16 reconstruction


def _pick_batch_tile(B, max_tm=MAX_TM):
    """Largest 128-multiple batch tile, capped at max_tm, that still leaves
    >= 2 grid steps whenever the batch allows (v7x has 2 TensorCores)."""
    b128 = ((B + 127) // 128) * 128
    half = (b128 // 2) // 128 * 128
    return max(128, min(max_tm, half if half > 0 else 128))


def prepare_params(params):
    """One-time weight prep: bf16 casts + zero-padding of the latent dim to a
    128-lane slab.  Call ONCE outside the jitted forward so these casts/pads
    never run per call."""
    w1, b1, w2, b2, w3, b3, w4, b4 = params
    latent = w2.shape[1]
    assert latent <= LAT_PAD
    pad = LAT_PAD - latent

    w1b = w1.astype(jnp.bfloat16)
    w4b = w4.astype(jnp.bfloat16)
    w2p = jnp.pad(w2, ((0, 0), (0, pad))).astype(jnp.bfloat16)
    b2p = jnp.pad(b2, ((0, 0), (0, pad))).astype(jnp.float32)
    w3p = jnp.pad(w3, ((0, pad), (0, 0))).astype(jnp.bfloat16)
    b1f = b1.astype(jnp.float32)
    b3f = b3.astype(jnp.float32)
    b4f = b4.astype(jnp.float32)
    return (w1b, b1f, w2p, b2p, w3p, b3f, w4b, b4f)


def autoencoder_forward(x, prepped, *, latent=AE_LATENT_SPACE_SIZE, tm=None):
    """Fused AutoEncoder forward. `prepped` = prepare_params(params).
    Returns (latent, reconstruction), both bf16."""
    w1b, b1f, w2p, b2p, w3p, b3f, w4b, b4f = prepped
    B, D = x.shape
    H = w1b.shape[1]
    lat_pad = w2p.shape[1]

    if tm is None:
        tm = _pick_batch_tile(B)
    b_pad = pl.cdiv(B, tm) * tm
    if b_pad != B:
        x = jnp.pad(x, ((0, b_pad - B), (0, 0)))

    grid = (b_pad // tm,)

    # ---- advisory cost estimate ----
    flops = 2 * b_pad * (D * H + H * lat_pad + lat_pad * H + H * D)
    transcendentals = b_pad * D                       # sigmoid on the reconstruction
    bytes_accessed = (
        b_pad * D * 4                                 # x (f32, read once in-kernel)
        + (D * H + H * lat_pad + lat_pad * H + H * D) * 2   # weights (bf16)
        + (H + lat_pad + H + D) * 4                   # biases (f32)
        + b_pad * lat_pad * 2 + b_pad * D * 2         # outputs (bf16)
    )

    lat_slab, rec = pl.pallas_call(
        _ae_kernel,
        out_shape=(
            jax.ShapeDtypeStruct((b_pad, lat_pad), jnp.bfloat16),   # latent slab
            jax.ShapeDtypeStruct((b_pad, D), jnp.bfloat16),         # reconstruction
        ),
        grid=grid,
        in_specs=[
            pl.BlockSpec((tm, D), lambda i: (i, 0)),          # x tile (streams, f32)
            pl.BlockSpec((D, H), lambda i: (0, 0)),           # w1 (VMEM-resident)
            pl.BlockSpec((1, H), lambda i: (0, 0)),           # b1
            pl.BlockSpec((H, lat_pad), lambda i: (0, 0)),     # w2 (lane-padded)
            pl.BlockSpec((1, lat_pad), lambda i: (0, 0)),     # b2 (lane-padded)
            pl.BlockSpec((lat_pad, H), lambda i: (0, 0)),     # w3 (row-padded)
            pl.BlockSpec((1, H), lambda i: (0, 0)),           # b3
            pl.BlockSpec((H, D), lambda i: (0, 0)),           # w4
            pl.BlockSpec((1, D), lambda i: (0, 0)),           # b4
        ],
        out_specs=(
            pl.BlockSpec((tm, lat_pad), lambda i: (i, 0)),    # latent tile (streams)
            pl.BlockSpec((tm, D), lambda i: (i, 0)),          # reconstruction tile
        ),
        compiler_params=pltpu.CompilerParams(
            dimension_semantics=("parallel",),                # v7x: shard steps over 2 TCs
            vmem_limit_bytes=32 << 20,                        # ample; safe on v7x's 64 MiB
        ),
        cost_estimate=pl.CostEstimate(
            flops=int(flops),
            transcendentals=int(transcendentals),
            bytes_accessed=int(bytes_accessed),
        ),
    )(x, w1b, b1f, w2p, b2p, w3p, b3f, w4b, b4f)

    # Only the lane slice (->latent cols) is required by the module contract;
    # skip the batch slice entirely when B is already tile-aligned.
    if b_pad == B:
        return lat_slab[:, :latent], rec
    return lat_slab[:B, :latent], rec[:B, :]


def init_params(key):
    """Deterministic synthetic parameters (shapes implied by the module)."""
    ks = jax.random.split(key, 8)

    def lin(kw, kb, fan_in, fan_out):
        w = (jax.random.normal(kw, (fan_in, fan_out), jnp.float32)
             * (1.0 / jnp.sqrt(fan_in)))
        b = 0.01 * jax.random.normal(kb, (1, fan_out), jnp.float32)
        return w, b

    w1, b1 = lin(ks[0], ks[1], D_IN, HIDDEN)
    w2, b2 = lin(ks[2], ks[3], HIDDEN, AE_LATENT_SPACE_SIZE)
    w3, b3 = lin(ks[4], ks[5], AE_LATENT_SPACE_SIZE, HIDDEN)
    w4, b4 = lin(ks[6], ks[7], HIDDEN, D_IN)
    return (w1, b1, w2, b2, w3, b3, w4, b4)


def reference_forward(x, params):
    """Plain-JAX reference mirroring the kernel's bf16-compute / f32-accumulate."""
    w1, b1, w2, b2, w3, b3, w4, b4 = params
    xb = x.astype(jnp.bfloat16)
    w1b, w2b, w3b, w4b = (w.astype(jnp.bfloat16) for w in (w1, w2, w3, w4))
    h1 = jnp.maximum(
        jnp.dot(xb, w1b, preferred_element_type=jnp.float32) + b1, 0.0)
    z = jnp.dot(h1.astype(jnp.bfloat16), w2b,
                preferred_element_type=jnp.float32) + b2
    h2 = jnp.maximum(
        jnp.dot(z.astype(jnp.bfloat16), w3b,
                preferred_element_type=jnp.float32) + b3, 0.0)
    y = jax.nn.sigmoid(
        jnp.dot(h2.astype(jnp.bfloat16), w4b,
                preferred_element_type=jnp.float32) + b4)
    return z, y


if __name__ == "__main__":
    key = jax.random.PRNGKey(0)
    kx, kp = jax.random.split(key)

    x = jax.random.normal(kx, (BATCH, D_IN), jnp.float32)
    params = init_params(kp)

    # One-time weight prep outside the jitted forward (no per-call casts/pads).
    prepped = prepare_params(params)

    fwd = jax.jit(autoencoder_forward)
    out1, out2 = jax.block_until_ready(fwd(x, prepped))

    ref1, ref2 = reference_forward(x, params)
    assert out1.shape == (BATCH, AE_LATENT_SPACE_SIZE)
    assert out2.shape == (BATCH, D_IN)
    assert out1.dtype == jnp.bfloat16 and out2.dtype == jnp.bfloat16
    assert jnp.allclose(out1.astype(jnp.float32), ref1, atol=2e-2, rtol=2e-2)
    assert jnp.allclose(out2.astype(jnp.float32), ref2, atol=2e-2, rtol=2e-2)

    print("KERNEL_OK")
</pallas_src>

<mosaic_0001>
module attributes {stable_mosaic.version = 11 : i64} {
  func.func @_ae_kernel(%arg0: i32, %arg1: memref<256x256xf32, #tpu.memory_space<vmem>>, %arg2: memref<256x128xbf16, #tpu.memory_space<vmem>>, %arg3: memref<1x128xf32, #tpu.memory_space<vmem>>, %arg4: memref<128x128xbf16, #tpu.memory_space<vmem>>, %arg5: memref<1x128xf32, #tpu.memory_space<vmem>>, %arg6: memref<128x128xbf16, #tpu.memory_space<vmem>>, %arg7: memref<1x128xf32, #tpu.memory_space<vmem>>, %arg8: memref<128x256xbf16, #tpu.memory_space<vmem>>, %arg9: memref<1x256xf32, #tpu.memory_space<vmem>>, %arg10: memref<256x128xbf16, #tpu.memory_space<vmem>>, %arg11: memref<256x256xbf16, #tpu.memory_space<vmem>>) attributes {dimension_semantics = [#tpu.dimension_semantics<parallel>], iteration_bounds = array<i64: 2>, scalar_prefetch = 0 : i64, scratch_operands = 0 : i64, tpu.core_type = #tpu.core_type<tc>, window_params = [{transform_indices = @transform_0, window_bounds = array<i64: 256, 256>}, {pipeline_mode = #tpu.pipeline_mode<synchronous>, transform_indices = @transform_1, window_bounds = array<i64: 256, 128>}, {pipeline_mode = #tpu.pipeline_mode<synchronous>, transform_indices = @transform_2, window_bounds = array<i64: 1, 128>}, {pipeline_mode = #tpu.pipeline_mode<synchronous>, transform_indices = @transform_3, window_bounds = array<i64: 128, 128>}, {pipeline_mode = #tpu.pipeline_mode<synchronous>, transform_indices = @transform_4, window_bounds = array<i64: 1, 128>}, {pipeline_mode = #tpu.pipeline_mode<synchronous>, transform_indices = @transform_5, window_bounds = array<i64: 128, 128>}, {pipeline_mode = #tpu.pipeline_mode<synchronous>, transform_indices = @transform_6, window_bounds = array<i64: 1, 128>}, {pipeline_mode = #tpu.pipeline_mode<synchronous>, transform_indices = @transform_7, window_bounds = array<i64: 128, 256>}, {pipeline_mode = #tpu.pipeline_mode<synchronous>, transform_indices = @transform_8, window_bounds = array<i64: 1, 256>}, {transform_indices = @transform_9, window_bounds = array<i64: 256, 128>}, {transform_indices = @transform_10, window_bounds = array<i64: 256, 256>}]} {
    %c0 = arith.constant 0 : index
    %c0_0 = arith.constant 0 : index
    %0 = vector.load %arg1[%c0, %c0_0] : memref<256x256xf32, #tpu.memory_space<vmem>>, vector<256x256xf32>
    %1 = arith.truncf %0 : vector<256x256xf32> to vector<256x256xbf16>
    %c0_1 = arith.constant 0 : index
    %c0_2 = arith.constant 0 : index
    %2 = vector.load %arg2[%c0_1, %c0_2] : memref<256x128xbf16, #tpu.memory_space<vmem>>, vector<256x128xbf16>
    %cst = arith.constant dense<0.000000e+00> : vector<256x128xf32>
    %3 = tpu.matmul %1, %2, %cst {dimension_numbers = #tpu.dot_dimension_numbers<[1], [0], [0], [1], [0, 0, 1, 1], [], []>} : vector<256x256xbf16>, vector<256x128xbf16>, vector<256x128xf32> -> vector<256x128xf32>
    %c0_3 = arith.constant 0 : index
    %c0_4 = arith.constant 0 : index
    %4 = vector.load %arg3[%c0_3, %c0_4] : memref<1x128xf32, #tpu.memory_space<vmem>>, vector<1x128xf32>
    %5 = vector.broadcast %4 : vector<1x128xf32> to vector<256x128xf32>
    %6 = arith.addf %3, %5 : vector<256x128xf32>
    %cst_5 = arith.constant 0.000000e+00 : f32
    %7 = vector.broadcast %cst_5 : f32 to vector<256x128xf32>
    %8 = arith.maximumf %6, %7 : vector<256x128xf32>
    %9 = arith.truncf %8 : vector<256x128xf32> to vector<256x128xbf16>
    %c0_6 = arith.constant 0 : index
    %c0_7 = arith.constant 0 : index
    %10 = vector.load %arg4[%c0_6, %c0_7] : memref<128x128xbf16, #tpu.memory_space<vmem>>, vector<128x128xbf16>
    %cst_8 = arith.constant dense<0.000000e+00> : vector<256x128xf32>
    %11 = tpu.matmul %9, %10, %cst_8 {dimension_numbers = #tpu.dot_dimension_numbers<[1], [0], [0], [1], [0, 0, 1, 1], [], []>} : vector<256x128xbf16>, vector<128x128xbf16>, vector<256x128xf32> -> vector<256x128xf32>
    %c0_9 = arith.constant 0 : index
    %c0_10 = arith.constant 0 : index
    %12 = vector.load %arg5[%c0_9, %c0_10] : memref<1x128xf32, #tpu.memory_space<vmem>>, vector<1x128xf32>
    %13 = vector.broadcast %12 : vector<1x128xf32> to vector<256x128xf32>
    %14 = arith.addf %11, %13 : vector<256x128xf32>
    %15 = arith.truncf %14 : vector<256x128xf32> to vector<256x128xbf16>
    %c0_11 = arith.constant 0 : index
    %c0_12 = arith.constant 0 : index
    %16 = vector.load %arg10[%c0_11, %c0_12] : memref<256x128xbf16, #tpu.memory_space<vmem>>, vector<256x128xbf16>
    tpu.vector_store %arg10[%c0_11, %c0_12], %15 {strides = array<i32>} : memref<256x128xbf16, #tpu.memory_space<vmem>>, vector<256x128xbf16>,
    %17 = arith.truncf %14 : vector<256x128xf32> to vector<256x128xbf16>
    %c0_13 = arith.constant 0 : index
    %c0_14 = arith.constant 0 : index
    %18 = vector.load %arg6[%c0_13, %c0_14] : memref<128x128xbf16, #tpu.memory_space<vmem>>, vector<128x128xbf16>
    %cst_15 = arith.constant dense<0.000000e+00> : vector<256x128xf32>
    %19 = tpu.matmul %17, %18, %cst_15 {dimension_numbers = #tpu.dot_dimension_numbers<[1], [0], [0], [1], [0, 0, 1, 1], [], []>} : vector<256x128xbf16>, vector<128x128xbf16>, vector<256x128xf32> -> vector<256x128xf32>
    %c0_16 = arith.constant 0 : index
    %c0_17 = arith.constant 0 : index
    %20 = vector.load %arg7[%c0_16, %c0_17] : memref<1x128xf32, #tpu.memory_space<vmem>>, vector<1x128xf32>
    %21 = vector.broadcast %20 : vector<1x128xf32> to vector<256x128xf32>
    %22 = arith.addf %19, %21 : vector<256x128xf32>
    %cst_18 = arith.constant 0.000000e+00 : f32
    %23 = vector.broadcast %cst_18 : f32 to vector<256x128xf32>
    %24 = arith.maximumf %22, %23 : vector<256x128xf32>
    %25 = arith.truncf %24 : vector<256x128xf32> to vector<256x128xbf16>
    %c0_19 = arith.constant 0 : index
    %c0_20 = arith.constant 0 : index
    %26 = vector.load %arg8[%c0_19, %c0_20] : memref<128x256xbf16, #tpu.memory_space<vmem>>, vector<128x256xbf16>
    %cst_21 = arith.constant dense<0.000000e+00> : vector<256x256xf32>
    %27 = tpu.matmul %25, %26, %cst_21 {dimension_numbers = #tpu.dot_dimension_numbers<[1], [0], [0], [1], [0, 0, 1, 1], [], []>} : vector<256x128xbf16>, vector<128x256xbf16>, vector<256x256xf32> -> vector<256x256xf32>
    %c0_22 = arith.constant 0 : index
    %c0_23 = arith.constant 0 : index
    %28 = vector.load %arg9[%c0_22, %c0_23] : memref<1x256xf32, #tpu.memory_space<vmem>>, vector<1x256xf32>
    %29 = vector.broadcast %28 : vector<1x256xf32> to vector<256x256xf32>
    %30 = arith.addf %27, %29 : vector<256x256xf32>
    %31 = arith.negf %30 : vector<256x256xf32>
    %32 = math.exp %31 : vector<256x256xf32>
    %cst_24 = arith.constant 1.000000e+00 : f32
    %33 = vector.broadcast %cst_24 : f32 to vector<256x256xf32>
    %34 = arith.addf %33, %32 : vector<256x256xf32>
    %35 = arith.divf %33, %34 : vector<256x256xf32>
    %36 = arith.truncf %35 : vector<256x256xf32> to vector<256x256xbf16>
    %c0_25 = arith.constant 0 : index
    %c0_26 = arith.constant 0 : index
    %37 = vector.load %arg11[%c0_25, %c0_26] : memref<256x256xbf16, #tpu.memory_space<vmem>>, vector<256x256xbf16>
    tpu.vector_store %arg11[%c0_25, %c0_26], %36 {strides = array<i32>} : memref<256x256xbf16, #tpu.memory_space<vmem>>, vector<256x256xbf16>,
    return
  }
  func.func @transform_0(%arg0: i32) -> (i32, i32) {
    %c0_i32 = arith.constant 0 : i32
    %c0_i32_0 = arith.constant 0 : i32
    return %arg0, %c0_i32 : i32, i32
  }
  func.func @transform_1(%arg0: i32) -> (i32, i32) {
    %c0_i32 = arith.constant 0 : i32
    %c0_i32_0 = arith.constant 0 : i32
    %c0_i32_1 = arith.constant 0 : i32
    return %c0_i32, %c0_i32_0 : i32, i32
  }
  func.func @transform_2(%arg0: i32) -> (i32, i32) {
    %c0_i32 = arith.constant 0 : i32
    %c0_i32_0 = arith.constant 0 : i32
    %c0_i32_1 = arith.constant 0 : i32
    return %c0_i32, %c0_i32_0 : i32, i32
  }
  func.func @transform_3(%arg0: i32) -> (i32, i32) {
    %c0_i32 = arith.constant 0 : i32
    %c0_i32_0 = arith.constant 0 : i32
    %c0_i32_1 = arith.constant 0 : i32
    return %c0_i32, %c0_i32_0 : i32, i32
  }
  func.func @transform_4(%arg0: i32) -> (i32, i32) {
    %c0_i32 = arith.constant 0 : i32
    %c0_i32_0 = arith.constant 0 : i32
    %c0_i32_1 = arith.constant 0 : i32
    return %c0_i32, %c0_i32_0 : i32, i32
  }
  func.func @transform_5(%arg0: i32) -> (i32, i32) {
    %c0_i32 = arith.constant 0 : i32
    %c0_i32_0 = arith.constant 0 : i32
    %c0_i32_1 = arith.constant 0 : i32
    return %c0_i32, %c0_i32_0 : i32, i32
  }
  func.func @transform_6(%arg0: i32) -> (i32, i32) {
    %c0_i32 = arith.constant 0 : i32
    %c0_i32_0 = arith.constant 0 : i32
    %c0_i32_1 = arith.constant 0 : i32
    return %c0_i32, %c0_i32_0 : i32, i32
  }
  func.func @transform_7(%arg0: i32) -> (i32, i32) {
    %c0_i32 = arith.constant 0 : i32
    %c0_i32_0 = arith.constant 0 : i32
    %c0_i32_1 = arith.constant 0 : i32
    return %c0_i32, %c0_i32_0 : i32, i32
  }
  func.func @transform_8(%arg0: i32) -> (i32, i32) {
    %c0_i32 = arith.constant 0 : i32
    %c0_i32_0 = arith.constant 0 : i32
    %c0_i32_1 = arith.constant 0 : i32
    return %c0_i32, %c0_i32_0 : i32, i32
  }
  func.func @transform_9(%arg0: i32) -> (i32, i32) {
    %c0_i32 = arith.constant 0 : i32
    %c0_i32_0 = arith.constant 0 : i32
    return %arg0, %c0_i32 : i32, i32
  }
  func.func @transform_10(%arg0: i32) -> (i32, i32) {
    %c0_i32 = arith.constant 0 : i32
    %c0_i32_0 = arith.constant 0 : i32
    return %arg0, %c0_i32 : i32, i32
  }
}

</mosaic_0001>

<llo_original>
// kernel: autoencoder_forward.1
$region0: #{autoencoder_forward.1}
  #allocation0 [shape = 'u32[]', space=smem, size = 0x4, offset = 0x4, fixed_abs, tag = 'smem constant byte address 0x4 - core index']
  #allocation1 [shape = 'u32[144,128]{1,0:T(1,128)}', space=vmem, size = 0x12000, scoped, tag = 'internal scratch']
  %s0 = inlined_call_operand.hbm [shape: f32[512,256], index: 0, kind: input, shape index: {}]
  %s1 = inlined_call_operand.hbm [shape: bf16[256,128], index: 1, kind: input, shape index: {}]
  %s2 = inlined_call_operand.vmem [shape: f32[1,128], index: 2, kind: input, shape index: {}]
  %s3 = inlined_call_operand.hbm [shape: bf16[128,128], index: 3, kind: input, shape index: {}]
  %s4 = inlined_call_operand.vmem [shape: f32[1,128], index: 4, kind: input, shape index: {}]
  %s5 = inlined_call_operand.hbm [shape: bf16[128,128], index: 5, kind: input, shape index: {}]
  %s6 = inlined_call_operand.vmem [shape: f32[1,128], index: 6, kind: input, shape index: {}]
  %s7 = inlined_call_operand.hbm [shape: bf16[128,256], index: 7, kind: input, shape index: {}]
  %s8 = inlined_call_operand.vmem [shape: f32[1,256], index: 8, kind: input, shape index: {}]
  %s9 = inlined_call_operand.vmem [shape: bf16[512,128], index: 9, kind: output, shape index: {0}]
  %s10 = inlined_call_operand.hbm [shape: bf16[512,256], index: 10, kind: output, shape index: {1}]
  %11 = xla_tuple %s9, %s10
  %s12 = sld [smem:[#allocation0]]
  $region97: #{autoencoder_forward.1} parent=0
    _
  %s14 = ssub.s32 1, %s12
  %s15 = scalar_select 0, %s14, %s12
  $region1: #{autoencoder_forward.1} parent=0
    #allocation2 [shape = 'u8[524288]{0}', space=vmem, size = 0x80000, scoped, tag = 'input window, operand 0']
    #allocation3 [shape = 's32[2]{0}', space=sflag, size = 0x8, scoped, tag = 'scoped memory for autoencoder_forward.1']
    #allocation4 [shape = 's32[2]{0}', space=sflag, size = 0x8, scoped, tag = 'scoped memory for autoencoder_forward.1']
    #allocation5 [shape = 'u8[65536]{0}', space=vmem, size = 0x10000, scoped, tag = 'input window, operand 1, single buffered']
    #allocation6 [shape = 's32[1]{0}', space=sflag, size = 0x4, scoped, tag = 'scoped memory for autoencoder_forward.1']
    #allocation7 [shape = 'u8[32768]{0}', space=vmem, size = 0x8000, scoped, tag = 'input window, operand 3, single buffered']
    #allocation8 [shape = 'u8[32768]{0}', space=vmem, size = 0x8000, scoped, tag = 'input window, operand 5, single buffered']
    #allocation9 [shape = 's32[1]{0}', space=sflag, size = 0x4, scoped, tag = 'scoped memory for autoencoder_forward.1']
    #allocation10 [shape = 'u8[65536]{0}', space=vmem, size = 0x10000, scoped, tag = 'input window, operand 7, single buffered']
    #allocation11 [shape = 'u8[262144]{0}', space=vmem, size = 0x40000, scoped, tag = 'output window, operand 1']
    %16 = vsyncpa [#allocation3], 0
    %s17 = scalar_lea.sflag [#allocation3], 1
    %18 = vsyncpa %s17, 0
    %19 = vsyncpa [#allocation6], 0
    %20 = vsyncpa [#allocation9], 0
    %21 = vsyncpa [#allocation4], 0
    %s22 = scalar_lea.sflag [#allocation4], 1
    %23 = vsyncpa %s22, 0
    loop: start=0, step=1, limit=4
    $region2: #{autoencoder_forward.1} parent=1 // loop_pre_header
      _
    $region3: #{autoencoder_forward.1} parent=1 // loop_header
      %s25 = sphi 0, %s29
      %p26 = scmp.ge.s32.totalorder %s25, 4
      %s35 = sphi 0, %s37
      %s38 = sphi 0, %s35
      %s39 = sphi 0, %s38
      %s55 = sphi 0, %s39
      %s59 = sphi 0, %s59
      %s61 = sphi 0, %s59
      %s62 = sphi 0, %s61
      %s76 = sphi 0, %s62
      %s80 = sphi 0, %s80
      %s82 = sphi 0, %s80
      %s83 = sphi 0, %s82
      %s97 = sphi 0, %s83
      %s101 = sphi 0, %s101
      %s103 = sphi 0, %s101
      %s104 = sphi 0, %s103
      %s118 = sphi 0, %s104
      %s122 = sphi 0, %s122
      %s124 = sphi 0, %s122
      %s125 = sphi 0, %s124
      %s139 = sphi 0, %s125
      %s143 = sphi 0, %s143
      %s145 = sphi 0, %s143
      %s146 = sphi 0, %s145
      %s160 = sphi 0, %s146
      %s164 = sphi 0, %s164
      %s166 = sphi 0, %s164
      %s167 = sphi 0, %s166
      %s181 = sphi 0, %s167
      %s185 = sphi 0, %s185
      %s187 = sphi 0, %s185
      %s188 = sphi 0, %s187
      %s202 = sphi 0, %s188
      %s206 = sphi 0, %s206
      %s208 = sphi 0, %s206
      %s209 = sphi 0, %s208
      %s223 = sphi 0, %s209
      %s229 = sphi 0, %s231
      %s232 = sphi 0, %s229
      %s233 = sphi 0, %s232
      %s249 = sphi 0, %s233
      %s255 = sphi 0, %s257
      %s258 = sphi 0, %s255
      %s259 = sphi 0, %s258
      %s275 = sphi 0, %s259
    $region4: #{autoencoder_forward.1} parent=1 // loop_header_branch
      %28 = sbr.rel (%p26) target = $region8
    $region5: #{autoencoder_forward.1} parent=1 // loop_body
      %s30 = ssub.s32 %s25, 1
      %s31 = ssub.s32 %s25, 2
      %s32 = sadd.s32 %s25, 1
      %s33 = ssub.s32 %s25, %s32
      %p34 = scmp.eq.s32.totalorder %s33, 0
      %s36 = sadd.s32 %s35, 1
      %s37 = scalar_select %p34, %s35, %s36
      %p40 = pneg %p34
      %p41 = scmp.eq.s32.totalorder %s25, 1
      %p42 = por %p40, %p41
      %p43 = scmp.ne.s32.totalorder %s35, %s38
      %p44 = scmp.eq.s32.totalorder %s25, 0
      %p45 = por %p43, %p44
      %p46 = scmp.ne.s32.totalorder %s35, %s38
      %p47 = scmp.eq.s32.totalorder %s30, 1
      %p48 = por %p46, %p47
      %p49 = scmp.ne.s32.totalorder %s38, %s39
      %p50 = scmp.eq.s32.totalorder %s30, 0
      %p51 = por %p49, %p50
      %p52 = scmp.ne.s32.totalorder %s38, %s39
      %p53 = scmp.eq.s32.totalorder %s31, 1
      %p54 = por %p52, %p53
      %p56 = scmp.ne.s32.totalorder %s39, %s55
      %p57 = scmp.eq.s32.totalorder %s31, 0
      %p58 = por %p56, %p57
      %s60 = sadd.s32 %s59, 1
      %p63 = scmp.eq.s32.totalorder %s25, 1
      %p64 = scmp.ne.s32.totalorder %s59, %s61
      %p65 = scmp.eq.s32.totalorder %s25, 0
      %p66 = por %p64, %p65
      %p67 = scmp.ne.s32.totalorder %s59, %s61
      %p68 = scmp.eq.s32.totalorder %s30, 1
      %p69 = por %p67, %p68
      %p70 = scmp.ne.s32.totalorder %s61, %s62
      %p71 = scmp.eq.s32.totalorder %s30, 0
      %p72 = por %p70, %p71
      %p73 = scmp.ne.s32.totalorder %s61, %s62
      %p74 = scmp.eq.s32.totalorder %s31, 1
      %p75 = por %p73, %p74
      %p77 = scmp.ne.s32.totalorder %s62, %s76
      %p78 = scmp.eq.s32.totalorder %s31, 0
      %p79 = por %p77, %p78
      %s81 = sadd.s32 %s80, 1
      %p84 = scmp.eq.s32.totalorder %s25, 1
      %p85 = scmp.ne.s32.totalorder %s80, %s82
      %p86 = scmp.eq.s32.totalorder %s25, 0
      %p87 = por %p85, %p86
      %p88 = scmp.ne.s32.totalorder %s80, %s82
      %p89 = scmp.eq.s32.totalorder %s30, 1
      %p90 = por %p88, %p89
      %p91 = scmp.ne.s32.totalorder %s82, %s83
      %p92 = scmp.eq.s32.totalorder %s30, 0
      %p93 = por %p91, %p92
      %p94 = scmp.ne.s32.totalorder %s82, %s83
      %p95 = scmp.eq.s32.totalorder %s31, 1
      %p96 = por %p94, %p95
      %p98 = scmp.ne.s32.totalorder %s83, %s97
      %p99 = scmp.eq.s32.totalorder %s31, 0
      %p100 = por %p98, %p99
      %s102 = sadd.s32 %s101, 1
      %p105 = scmp.eq.s32.totalorder %s25, 1
      %p106 = scmp.ne.s32.totalorder %s101, %s103
      %p107 = scmp.eq.s32.totalorder %s25, 0
      %p108 = por %p106, %p107
      %p109 = scmp.ne.s32.totalorder %s101, %s103
      %p110 = scmp.eq.s32.totalorder %s30, 1
      %p111 = por %p109, %p110
      %p112 = scmp.ne.s32.totalorder %s103, %s104
      %p113 = scmp.eq.s32.totalorder %s30, 0
      %p114 = por %p112, %p113
      %p115 = scmp.ne.s32.totalorder %s103, %s104
      %p116 = scmp.eq.s32.totalorder %s31, 1
      %p117 = por %p115, %p116
      %p119 = scmp.ne.s32.totalorder %s104, %s118
      %p120 = scmp.eq.s32.totalorder %s31, 0
      %p121 = por %p119, %p120
      %s123 = sadd.s32 %s122, 1
      %p126 = scmp.eq.s32.totalorder %s25, 1
      %p127 = scmp.ne.s32.totalorder %s122, %s124
      %p128 = scmp.eq.s32.totalorder %s25, 0
      %p129 = por %p127, %p128
      %p130 = scmp.ne.s32.totalorder %s122, %s124
      %p131 = scmp.eq.s32.totalorder %s30, 1
      %p132 = por %p130, %p131
      %p133 = scmp.ne.s32.totalorder %s124, %s125
      %p134 = scmp.eq.s32.totalorder %s30, 0
      %p135 = por %p133, %p134
      %p136 = scmp.ne.s32.totalorder %s124, %s125
      %p137 = scmp.eq.s32.totalorder %s31, 1
      %p138 = por %p136, %p137
      %p140 = scmp.ne.s32.totalorder %s125, %s139
      %p141 = scmp.eq.s32.totalorder %s31, 0
      %p142 = por %p140, %p141
      %s144 = sadd.s32 %s143, 1
      %p147 = scmp.eq.s32.totalorder %s25, 1
      %p148 = scmp.ne.s32.totalorder %s143, %s145
      %p149 = scmp.eq.s32.totalorder %s25, 0
      %p150 = por %p148, %p149
      %p151 = scmp.ne.s32.totalorder %s143, %s145
      %p152 = scmp.eq.s32.totalorder %s30, 1
      %p153 = por %p151, %p152
      %p154 = scmp.ne.s32.totalorder %s145, %s146
      %p155 = scmp.eq.s32.totalorder %s30, 0
      %p156 = por %p154, %p155
      %p157 = scmp.ne.s32.totalorder %s145, %s146
      %p158 = scmp.eq.s32.totalorder %s31, 1
      %p159 = por %p157, %p158
      %p161 = scmp.ne.s32.totalorder %s146, %s160
      %p162 = scmp.eq.s32.totalorder %s31, 0
      %p163 = por %p161, %p162
      %s165 = sadd.s32 %s164, 1
      %p168 = scmp.eq.s32.totalorder %s25, 1
      %p169 = scmp.ne.s32.totalorder %s164, %s166
      %p170 = scmp.eq.s32.totalorder %s25, 0
      %p171 = por %p169, %p170
      %p172 = scmp.ne.s32.totalorder %s164, %s166
      %p173 = scmp.eq.s32.totalorder %s30, 1
      %p174 = por %p172, %p173
      %p175 = scmp.ne.s32.totalorder %s166, %s167
      %p176 = scmp.eq.s32.totalorder %s30, 0
      %p177 = por %p175, %p176
      %p178 = scmp.ne.s32.totalorder %s166, %s167
      %p179 = scmp.eq.s32.totalorder %s31, 1
      %p180 = por %p178, %p179
      %p182 = scmp.ne.s32.totalorder %s167, %s181
      %p183 = scmp.eq.s32.totalorder %s31, 0
      %p184 = por %p182, %p183
      %s186 = sadd.s32 %s185, 1
      %p189 = scmp.eq.s32.totalorder %s25, 1
      %p190 = scmp.ne.s32.totalorder %s185, %s187
      %p191 = scmp.eq.s32.totalorder %s25, 0
      %p192 = por %p190, %p191
      %p193 = scmp.ne.s32.totalorder %s185, %s187
      %p194 = scmp.eq.s32.totalorder %s30, 1
      %p195 = por %p193, %p194
      %p196 = scmp.ne.s32.totalorder %s187, %s188
      %p197 = scmp.eq.s32.totalorder %s30, 0
      %p198 = por %p196, %p197
      %p199 = scmp.ne.s32.totalorder %s187, %s188
      %p200 = scmp.eq.s32.totalorder %s31, 1
      %p201 = por %p199, %p200
      %p203 = scmp.ne.s32.totalorder %s188, %s202
      %p204 = scmp.eq.s32.totalorder %s31, 0
      %p205 = por %p203, %p204
      %s207 = sadd.s32 %s206, 1
      %p210 = scmp.eq.s32.totalorder %s25, 1
      %p211 = scmp.ne.s32.totalorder %s206, %s208
      %p212 = scmp.eq.s32.totalorder %s25, 0
      %p213 = por %p211, %p212
      %p214 = scmp.ne.s32.totalorder %s206, %s208
      %p215 = scmp.eq.s32.totalorder %s30, 1
      %p216 = por %p214, %p215
      %p217 = scmp.ne.s32.totalorder %s208, %s209
      %p218 = scmp.eq.s32.totalorder %s30, 0
      %p219 = por %p217, %p218
      %p220 = scmp.ne.s32.totalorder %s208, %s209
      %p221 = scmp.eq.s32.totalorder %s31, 1
      %p222 = por %p220, %p221
      %p224 = scmp.ne.s32.totalorder %s209, %s223
      %p225 = scmp.eq.s32.totalorder %s31, 0
      %p226 = por %p224, %p225
      %s227 = ssub.s32 %s25, %s32
      %p228 = scmp.eq.s32.totalorder %s227, 0
      %s230 = sadd.s32 %s229, 1
      %s231 = scalar_select %p228, %s229, %s230
      %p234 = pneg %p228
      %p235 = scmp.eq.s32.totalorder %s25, 1
      %p236 = por %p234, %p235
      %p237 = scmp.ne.s32.totalorder %s229, %s232
      %p238 = scmp.eq.s32.totalorder %s25, 0
      %p239 = por %p237, %p238
      %p240 = scmp.ne.s32.totalorder %s229, %s232
      %p241 = scmp.eq.s32.totalorder %s30, 1
      %p242 = por %p240, %p241
      %p243 = scmp.ne.s32.totalorder %s232, %s233
      %p244 = scmp.eq.s32.totalorder %s30, 0
      %p245 = por %p243, %p244
      %p246 = scmp.ne.s32.totalorder %s232, %s233
      %p247 = scmp.eq.s32.totalorder %s31, 1
      %p248 = por %p246, %p247
      %p250 = scmp.ne.s32.totalorder %s233, %s249
      %p251 = scmp.eq.s32.totalorder %s31, 0
      %p252 = por %p250, %p251
      %s253 = ssub.s32 %s25, %s32
      %p254 = scmp.eq.s32.totalorder %s253, 0
      %s256 = sadd.s32 %s255, 1
      %s257 = scalar_select %p254, %s255, %s256
      %p260 = pneg %p254
      %p261 = scmp.eq.s32.totalorder %s25, 1
      %p262 = por %p260, %p261
      %p263 = scmp.ne.s32.totalorder %s255, %s258
      %p264 = scmp.eq.s32.totalorder %s25, 0
      %p265 = por %p263, %p264
      %p266 = scmp.ne.s32.totalorder %s255, %s258
      %p267 = scmp.eq.s32.totalorder %s30, 1
      %p268 = por %p266, %p267
      %p269 = scmp.ne.s32.totalorder %s258, %s259
      %p270 = scmp.eq.s32.totalorder %s30, 0
      %p271 = por %p269, %p270
      %p272 = scmp.ne.s32.totalorder %s258, %s259
      %p273 = scmp.eq.s32.totalorder %s31, 1
      %p274 = por %p272, %p273
      %p276 = scmp.ne.s32.totalorder %s259, %s275
      %p277 = scmp.eq.s32.totalorder %s31, 0
      %p278 = por %p276, %p277
      %p279 = scmp.le.s32.totalorder 1, %s25
      %p280 = scmp.lt.s32.totalorder %s25, 3
      %p281 = pnand %p279, %p280
      %p282 = pneg %p281
      // Predicated region
      $region9: #{autoencoder_forward.1} parent=5 // pred_check
        _
      $region10: #{autoencoder_forward.1} parent=5 // pred_check_branch
        %284 = sbr.rel (%p281) target = $region12
      $region11: #{autoencoder_forward.1} parent=5 // pred_region
        %s285 = ssub.s32 %s25, 1
        // Predicated region
        $region13: #{autoencoder_forward.1} parent=11 // pred_check
          %p286 = pneg %p72
        $region14: #{autoencoder_forward.1} parent=11 // pred_check_branch
          %288 = sbr.rel (%p286) target = $region16
        $region15: #{autoencoder_forward.1} parent=11 // pred_region
          %s290 = ssub.s32 2048, 2048
          %291 = vsyncadd [#allocation6], %s290
          %s292 = sshll.u32 [#allocation5], 4
          %s293 = int_to_ptr.vmem [resolvable:$true] %s292
          %298 = dma.hbm_to_vmem [thread:$0]  %s1, 2048, %s293, [#allocation6], 64, 64, 4
        $region16: #{autoencoder_forward.1} parent=11 // pred_fallthru
          _
        // Predicated region
        $region17: #{autoencoder_forward.1} parent=11 // pred_check
          %p299 = pneg %p93
        $region18: #{autoencoder_forward.1} parent=11 // pred_check_branch
          %301 = sbr.rel (%p299) target = $region20
        $region19: #{autoencoder_forward.1} parent=11 // pred_region
          _
        $region20: #{autoencoder_forward.1} parent=11 // pred_fallthru
          _
        // Predicated region
        $region21: #{autoencoder_forward.1} parent=11 // pred_check
          %p302 = pneg %p114
        $region22: #{autoencoder_forward.1} parent=11 // pred_check_branch
          %304 = sbr.rel (%p302) target = $region24
        $region23: #{autoencoder_forward.1} parent=11 // pred_region
          %s306 = ssub.s32 1024, 1024
          %307 = vsyncadd [#allocation6], %s306
          %s308 = sshll.u32 [#allocation7], 4
          %s309 = int_to_ptr.vmem [resolvable:$true] %s308
          %314 = dma.hbm_to_vmem [thread:$0]  %s3, 1024, %s309, [#allocation6], 64, 64, 4
        $region24: #{autoencoder_forward.1} parent=11 // pred_fallthru
          _
        // Predicated region
        $region25: #{autoencoder_forward.1} parent=11 // pred_check
          %p315 = pneg %p135
        $region26: #{autoencoder_forward.1} parent=11 // pred_check_branch
          %317 = sbr.rel (%p315) target = $region28
        $region27: #{autoencoder_forward.1} parent=11 // pred_region
          _
        $region28: #{autoencoder_forward.1} parent=11 // pred_fallthru
          _
        // Predicated region
        $region29: #{autoencoder_forward.1} parent=11 // pred_check
          %p318 = pneg %p156
        $region30: #{autoencoder_forward.1} parent=11 // pred_check_branch
          %320 = sbr.rel (%p318) target = $region32
        $region31: #{autoencoder_forward.1} parent=11 // pred_region
          %s322 = ssub.s32 1024, 1024
          %323 = vsyncadd [#allocation9], %s322
          %s324 = sshll.u32 [#allocation8], 4
          %s325 = int_to_ptr.vmem [resolvable:$true] %s324
          %330 = dma.hbm_to_vmem [thread:$0]  %s5, 1024, %s325, [#allocation9], 64, 64, 4
        $region32: #{autoencoder_forward.1} parent=11 // pred_fallthru
          _
        // Predicated region
        $region33: #{autoencoder_forward.1} parent=11 // pred_check
          %p331 = pneg %p177
        $region34: #{autoencoder_forward.1} parent=11 // pred_check_branch
          %333 = sbr.rel (%p331) target = $region36
        $region35: #{autoencoder_forward.1} parent=11 // pred_region
          _
        $region36: #{autoencoder_forward.1} parent=11 // pred_fallthru
          _
        // Predicated region
        $region37: #{autoencoder_forward.1} parent=11 // pred_check
          %p334 = pneg %p198
        $region38: #{autoencoder_forward.1} parent=11 // pred_check_branch
          %336 = sbr.rel (%p334) target = $region40
        $region39: #{autoencoder_forward.1} parent=11 // pred_region
          %s338 = ssub.s32 2048, 2048
          %339 = vsyncadd [#allocation9], %s338
          %s340 = sshll.u32 [#allocation10], 4
          %s341 = int_to_ptr.vmem [resolvable:$true] %s340
          %346 = dma.hbm_to_vmem [thread:$0]  %s7, 2048, %s341, [#allocation9], 128, 128, 8
        $region40: #{autoencoder_forward.1} parent=11 // pred_fallthru
          _
        // Predicated region
        $region41: #{autoencoder_forward.1} parent=11 // pred_check
          %p347 = pneg %p219
        $region42: #{autoencoder_forward.1} parent=11 // pred_check_branch
          %349 = sbr.rel (%p347) target = $region44
        $region43: #{autoencoder_forward.1} parent=11 // pred_region
          _
        $region44: #{autoencoder_forward.1} parent=11 // pred_fallthru
          _
      $region12: #{autoencoder_forward.1} parent=5 // pred_fallthru
        _
      %p350 = scmp.lt.s32.totalorder %s25, 2
      // Predicated region
      $region45: #{autoencoder_forward.1} parent=5 // pred_check
        %p351 = pneg %p350
      $region46: #{autoencoder_forward.1} parent=5 // pred_check_branch
        %353 = sbr.rel (%p351) target = $region48
      $region47: #{autoencoder_forward.1} parent=5 // pred_region
        // Predicated region
        $region49: #{autoencoder_forward.1} parent=47 // pred_check
          %p354 = pneg %p45
        $region50: #{autoencoder_forward.1} parent=47 // pred_check_branch
          %356 = sbr.rel (%p354) target = $region52
        $region51: #{autoencoder_forward.1} parent=47 // pred_region
          %s357 = sand.u32 %s35, 1
          %s358 = scalar_lea.sflag [#allocation3], %s357
          %s359 = sand.u32 %s35, 1
          %s360 = smul.addr %s359, 512
          %s361 = scalar_lea.vmem [#allocation2], %s360
          %s362 = smul.u32 32, %s25
          %s364 = ssub.s32 8192, 8192
          %365 = vsyncadd %s358, %s364
          %s366 = smul.addr %s362, 2
          %s367 = smul.addr %s366, 128
          %s368 = scalar_lea.hbm %s0, %s367
          %s369 = sshll.u32 %s361, 4
          %s370 = int_to_ptr.vmem [resolvable:$true] %s369
          %375 = dma.hbm_to_vmem [thread:$0]  %s368, 8192, %s370, %s358, 256, 256, 16
        $region52: #{autoencoder_forward.1} parent=47 // pred_fallthru
          _
      $region48: #{autoencoder_forward.1} parent=5 // pred_fallthru
        _
      %p376 = scmp.le.s32.totalorder 1, %s25
      %p377 = scmp.lt.s32.totalorder %s25, 3
      %p378 = pnand %p376, %p377
      %p379 = pneg %p378
      // Predicated region
      $region53: #{autoencoder_forward.1} parent=5 // pred_check
        _
      $region54: #{autoencoder_forward.1} parent=5 // pred_check_branch
        %381 = sbr.rel (%p378) target = $region56
      $region55: #{autoencoder_forward.1} parent=5 // pred_region
        %s382 = ssub.s32 %s25, 1
        %s383 = sand.u32 %s38, 1
        %s384 = scalar_lea.sflag [#allocation3], %s383
        %s385 = sand.u32 %s38, 1
        %s386 = smul.addr %s385, 512
        %s387 = scalar_lea.vmem [#allocation2], %s386
        // Predicated region
        $region57: #{autoencoder_forward.1} parent=55 // pred_check
          %p388 = pneg %p51
        $region58: #{autoencoder_forward.1} parent=55 // pred_check_branch
          %390 = sbr.rel (%p388) target = $region60
        $region59: #{autoencoder_forward.1} parent=55 // pred_region
          %391 = dma.done %s384, 8192
        $region60: #{autoencoder_forward.1} parent=55 // pred_fallthru
          _
        // Predicated region
        $region61: #{autoencoder_forward.1} parent=55 // pred_check
          %p392 = pneg %p72
        $region62: #{autoencoder_forward.1} parent=55 // pred_check_branch
          %394 = sbr.rel (%p392) target = $region64
        $region63: #{autoencoder_forward.1} parent=55 // pred_region
          %395 = dma.done [#allocation6], 2048
        $region64: #{autoencoder_forward.1} parent=55 // pred_fallthru
          _
        // Predicated region
        $region65: #{autoencoder_forward.1} parent=55 // pred_check
          %p396 = pneg %p114
        $region66: #{autoencoder_forward.1} parent=55 // pred_check_branch
          %398 = sbr.rel (%p396) target = $region68
        $region67: #{autoencoder_forward.1} parent=55 // pred_region
          %399 = dma.done [#allocation6], 1024
        $region68: #{autoencoder_forward.1} parent=55 // pred_fallthru
          _
        // Predicated region
        $region69: #{autoencoder_forward.1} parent=55 // pred_check
          %p400 = pneg %p156
        $region70: #{autoencoder_forward.1} parent=55 // pred_check_branch
          %402 = sbr.rel (%p400) target = $region72
        $region71: #{autoencoder_forward.1} parent=55 // pred_region
          %403 = dma.done [#allocation9], 1024
        $region72: #{autoencoder_forward.1} parent=55 // pred_fallthru
          _
        // Predicated region
        $region73: #{autoencoder_forward.1} parent=55 // pred_check
          %p404 = pneg %p198
        $region74: #{autoencoder_forward.1} parent=55 // pred_check_branch
          %406 = sbr.rel (%p404) target = $region76
        $region75: #{autoencoder_forward.1} parent=55 // pred_region
          %407 = dma.done [#allocation9], 2048
        $region76: #{autoencoder_forward.1} parent=55 // pred_fallthru
          _
        %s408 = sand.u32 %s38, 1
        %s409 = scalar_lea.sflag [#allocation3], %s408
        %s410 = sand.u32 %s38, 1
        %s411 = smul.addr %s410, 512
        %s412 = scalar_lea.vmem [#allocation2], %s411
        %p413 = pneg %p51
        %p414 = pneg %p48
        %p415 = pneg %p72
        %p416 = pneg %p69
        %p417 = pneg %p93
        %p418 = pneg %p90
        %p419 = pneg %p114
        %p420 = pneg %p111
        %p421 = pneg %p135
        %p422 = pneg %p132
        %p423 = pneg %p156
        %p424 = pneg %p153
        %p425 = pneg %p177
        %p426 = pneg %p174
        %p427 = pneg %p198
        %p428 = pneg %p195
        %p429 = pneg %p219
        %p430 = pneg %p216
        %p431 = pneg %p245
        %p432 = pneg %p242
        %s433 = smul.u32 32, %s30
        %p434 = scmp.lt.s32.totalorder %s433, 63
        %s435 = scalar_select %p434, %s433, 63
        %s436 = smul.addr %s435, 4
        %s437 = scalar_lea.vmem %s9, %s436
        %p438 = pneg %p271
        %p439 = pneg %p268
        %s440 = sand.u32 %s258, 1
        %s441 = scalar_lea.sflag [#allocation4], %s440
        %s442 = sand.u32 %s258, 1
        %s443 = smul.addr %s442, 256
        %s444 = scalar_lea.vmem [#allocation11], %s443
        %s445 = smul.u32 32, %s30
        %s446 = smul.u32 32, %s30
        %p447 = scmp.lt.s32.totalorder %s446, 63
        %s448 = scalar_select %p447, %s446, 63
        %s449 = smul.addr %s448, 4
        %s450 = scalar_lea.vmem %s9, %s449
        %s451 = smul.u32 32, %s30
        %s452 = smul.u32 32, %s30
        %v454 = vld [vmem:[%s387] sm:$0xff]
        %v455 = vld [vmem:[%s387 + $0x8] sm:$0xff]
        %v456 = vld [vmem:[%s387 + $0x10] sm:$0xff]
        %v457 = vld [vmem:[%s387 + $0x18] sm:$0xff]
        %v458 = vld [vmem:[%s387 + $0x20] sm:$0xff]
        %v459 = vld [vmem:[%s387 + $0x28] sm:$0xff]
        %v460 = vld [vmem:[%s387 + $0x30] sm:$0xff]
        %v461 = vld [vmem:[%s387 + $0x38] sm:$0xff]
        %v462 = vld [vmem:[%s387 + $0x40] sm:$0xff]
        %v463 = vld [vmem:[%s387 + $0x48] sm:$0xff]
        %v464 = vld [vmem:[%s387 + $0x50] sm:$0xff]
        %v465 = vld [vmem:[%s387 + $0x58] sm:$0xff]
        %v466 = vld [vmem:[%s387 + $0x60] sm:$0xff]
        %v467 = vld [vmem:[%s387 + $0x68] sm:$0xff]
        %v468 = vld [vmem:[%s387 + $0x70] sm:$0xff]
        %v469 = vld [vmem:[%s387 + $0x78] sm:$0xff]
        %v470 = vld [vmem:[%s387 + $0x80] sm:$0xff]
        %v471 = vld [vmem:[%s387 + $0x88] sm:$0xff]
        %v472 = vld [vmem:[%s387 + $0x90] sm:$0xff]
        %v473 = vld [vmem:[%s387 + $0x98] sm:$0xff]
        %v474 = vld [vmem:[%s387 + $0xa0] sm:$0xff]
        %v475 = vld [vmem:[%s387 + $0xa8] sm:$0xff]
        %v476 = vld [vmem:[%s387 + $0xb0] sm:$0xff]
        %v477 = vld [vmem:[%s387 + $0xb8] sm:$0xff]
        %v478 = vld [vmem:[%s387 + $0xc0] sm:$0xff]
        %v479 = vld [vmem:[%s387 + $0xc8] sm:$0xff]
        %v480 = vld [vmem:[%s387 + $0xd0] sm:$0xff]
        %v481 = vld [vmem:[%s387 + $0xd8] sm:$0xff]
        %v482 = vld [vmem:[%s387 + $0xe0] sm:$0xff]
        %v483 = vld [vmem:[%s387 + $0xe8] sm:$0xff]
        %v484 = vld [vmem:[%s387 + $0xf0] sm:$0xff]
        %v485 = vld [vmem:[%s387 + $0xf8] sm:$0xff]
        %v486 = vld [vmem:[%s387 + $0x100] sm:$0xff]
        %v487 = vld [vmem:[%s387 + $0x108] sm:$0xff]
        %v488 = vld [vmem:[%s387 + $0x110] sm:$0xff]
        %v489 = vld [vmem:[%s387 + $0x118] sm:$0xff]
        %v490 = vld [vmem:[%s387 + $0x120] sm:$0xff]
        %v491 = vld [vmem:[%s387 + $0x128] sm:$0xff]
        %v492 = vld [vmem:[%s387 + $0x130] sm:$0xff]
        %v493 = vld [vmem:[%s387 + $0x138] sm:$0xff]
        %v494 = vld [vmem:[%s387 + $0x140] sm:$0xff]
        %v495 = vld [vmem:[%s387 + $0x148] sm:$0xff]
        %v496 = vld [vmem:[%s387 + $0x150] sm:$0xff]
        %v497 = vld [vmem:[%s387 + $0x158] sm:$0xff]
        %v498 = vld [vmem:[%s387 + $0x160] sm:$0xff]
        %v499 = vld [vmem:[%s387 + $0x168] sm:$0xff]
        %v500 = vld [vmem:[%s387 + $0x170] sm:$0xff]
        %v501 = vld [vmem:[%s387 + $0x178] sm:$0xff]
        %v502 = vld [vmem:[%s387 + $0x180] sm:$0xff]
        %v503 = vld [vmem:[%s387 + $0x188] sm:$0xff]
        %v504 = vld [vmem:[%s387 + $0x190] sm:$0xff]
        %v505 = vld [vmem:[%s387 + $0x198] sm:$0xff]
        %v506 = vld [vmem:[%s387 + $0x1a0] sm:$0xff]
        %v507 = vld [vmem:[%s387 + $0x1a8] sm:$0xff]
        %v508 = vld [vmem:[%s387 + $0x1b0] sm:$0xff]
        %v509 = vld [vmem:[%s387 + $0x1b8] sm:$0xff]
        %v510 = vld [vmem:[%s387 + $0x1c0] sm:$0xff]
        %v511 = vld [vmem:[%s387 + $0x1c8] sm:$0xff]
        %v512 = vld [vmem:[%s387 + $0x1d0] sm:$0xff]
        %v513 = vld [vmem:[%s387 + $0x1d8] sm:$0xff]
        %v514 = vld [vmem:[%s387 + $0x1e0] sm:$0xff]
        %v515 = vld [vmem:[%s387 + $0x1e8] sm:$0xff]
        %v516 = vld [vmem:[%s387 + $0x1f0] sm:$0xff]
        %v517 = vld [vmem:[%s387 + $0x1f8] sm:$0xff]
        %v518 = vpack.c.bf16 %v456, %v454
        %v519 = vpack.c.bf16 %v457, %v455
        %v520 = vpack.c.bf16 %v460, %v458
        %v521 = vpack.c.bf16 %v461, %v459
        %v522 = vpack.c.bf16 %v464, %v462
        %v523 = vpack.c.bf16 %v465, %v463
        %v524 = vpack.c.bf16 %v468, %v466
        %v525 = vpack.c.bf16 %v469, %v467
        %v526 = vpack.c.bf16 %v472, %v470
        %v527 = vpack.c.bf16 %v473, %v471
        %v528 = vpack.c.bf16 %v476, %v474
        %v529 = vpack.c.bf16 %v477, %v475
        %v530 = vpack.c.bf16 %v480, %v478
        %v531 = vpack.c.bf16 %v481, %v479
        %v532 = vpack.c.bf16 %v484, %v482
        %v533 = vpack.c.bf16 %v485, %v483
        %v534 = vpack.c.bf16 %v488, %v486
        %v535 = vpack.c.bf16 %v489, %v487
        %v536 = vpack.c.bf16 %v492, %v490
        %v537 = vpack.c.bf16 %v493, %v491
        %v538 = vpack.c.bf16 %v496, %v494
        %v539 = vpack.c.bf16 %v497, %v495
        %v540 = vpack.c.bf16 %v500, %v498
        %v541 = vpack.c.bf16 %v501, %v499
        %v542 = vpack.c.bf16 %v504, %v502
        %v543 = vpack.c.bf16 %v505, %v503
        %v544 = vpack.c.bf16 %v508, %v506
        %v545 = vpack.c.bf16 %v509, %v507
        %v546 = vpack.c.bf16 %v512, %v510
        %v547 = vpack.c.bf16 %v513, %v511
        %v548 = vpack.c.bf16 %v516, %v514
        %v549 = vpack.c.bf16 %v517, %v515
        %v550 = vld [vmem:[#allocation5] sm:$0xf]
        %v551 = vld [vmem:[#allocation5 + $0x4] sm:$0xf]
        %v552 = vld [vmem:[#allocation5 + $0x8] sm:$0xf]
        %v553 = vld [vmem:[#allocation5 + $0xc] sm:$0xf]
        %v554 = vld [vmem:[#allocation5 + $0x10] sm:$0xf]
        %v555 = vld [vmem:[#allocation5 + $0x14] sm:$0xf]
        %v556 = vld [vmem:[#allocation5 + $0x18] sm:$0xf]
        %v557 = vld [vmem:[#allocation5 + $0x1c] sm:$0xf]
        %v558 = vld [vmem:[#allocation5 + $0x20] sm:$0xf]
        %v559 = vld [vmem:[#allocation5 + $0x24] sm:$0xf]
        %v560 = vld [vmem:[#allocation5 + $0x28] sm:$0xf]
        %v561 = vld [vmem:[#allocation5 + $0x2c] sm:$0xf]
        %v562 = vld [vmem:[#allocation5 + $0x30] sm:$0xf]
        %v563 = vld [vmem:[#allocation5 + $0x34] sm:$0xf]
        %v564 = vld [vmem:[#allocation5 + $0x38] sm:$0xf]
        %v565 = vld [vmem:[#allocation5 + $0x3c] sm:$0xf]
        %v566 = vld [vmem:[#allocation5 + $0x40] sm:$0xf]
        %v567 = vld [vmem:[#allocation5 + $0x44] sm:$0xf]
        %v568 = vld [vmem:[#allocation5 + $0x48] sm:$0xf]
        %v569 = vld [vmem:[#allocation5 + $0x4c] sm:$0xf]
        %v570 = vld [vmem:[#allocation5 + $0x50] sm:$0xf]
        %v571 = vld [vmem:[#allocation5 + $0x54] sm:$0xf]
        %v572 = vld [vmem:[#allocation5 + $0x58] sm:$0xf]
        %v573 = vld [vmem:[#allocation5 + $0x5c] sm:$0xf]
        %v574 = vld [vmem:[#allocation5 + $0x60] sm:$0xf]
        %v575 = vld [vmem:[#allocation5 + $0x64] sm:$0xf]
        %v576 = vld [vmem:[#allocation5 + $0x68] sm:$0xf]
        %v577 = vld [vmem:[#allocation5 + $0x6c] sm:$0xf]
        %v578 = vld [vmem:[#allocation5 + $0x70] sm:$0xf]
        %v579 = vld [vmem:[#allocation5 + $0x74] sm:$0xf]
        %v580 = vld [vmem:[#allocation5 + $0x78] sm:$0xf]
        %v581 = vld [vmem:[#allocation5 + $0x7c] sm:$0xf]
        %v582 = vld [vmem:[%s2] sm:$0x1]
        %v584 = vlaneseq
        %v585 = vshrl.u32 %v584, 7
        %v586 = vsub.s32 0, %v585
        %v587 = vrot.slane %v582, %v586
        %v621 = vunpack.c.l.b16 %v550
        %v622 = vunpack.c.l.b16 %v551
        %v623 = vunpack.c.l.b16 %v552
        %v624 = vunpack.c.l.b16 %v553
        %v625 = vunpack.c.l.b16 %v554
        %v626 = vunpack.c.l.b16 %v555
        %v627 = vunpack.c.l.b16 %v556
        %v628 = vunpack.c.l.b16 %v557
        %v629 = vunpack.c.l.b16 %v558
        %v630 = vunpack.c.l.b16 %v559
        %v631 = vunpack.c.l.b16 %v560
        %v632 = vunpack.c.l.b16 %v561
        %v633 = vunpack.c.l.b16 %v562
        %v634 = vunpack.c.l.b16 %v563
        %v635 = vunpack.c.l.b16 %v564
        %v636 = vunpack.c.l.b16 %v565
        %v637 = vunpack.c.l.b16 %v566
        %v638 = vunpack.c.l.b16 %v567
        %v639 = vunpack.c.l.b16 %v568
        %v640 = vunpack.c.l.b16 %v569
        %v641 = vunpack.c.l.b16 %v570
        %v642 = vunpack.c.l.b16 %v571
        %v643 = vunpack.c.l.b16 %v572
        %v644 = vunpack.c.l.b16 %v573
        %v645 = vunpack.c.l.b16 %v574
        %v646 = vunpack.c.l.b16 %v575
        %v647 = vunpack.c.l.b16 %v576
        %v648 = vunpack.c.l.b16 %v577
        %v649 = vunpack.c.l.b16 %v578
        %v650 = vunpack.c.l.b16 %v579
        %v651 = vunpack.c.l.b16 %v580
        %v652 = vunpack.c.l.b16 %v581
        %v653 = vpack.c.b16 %v622, %v621
        %v654 = vpack.c.b16 %v624, %v623
        %v655 = vpack.c.b16 %v626, %v625
        %v656 = vpack.c.b16 %v628, %v627
        %v657 = vpack.c.b16 %v630, %v629
        %v658 = vpack.c.b16 %v632, %v631
        %v659 = vpack.c.b16 %v634, %v633
        %v660 = vpack.c.b16 %v636, %v635
        %v661 = vpack.c.b16 %v638, %v637
        %v662 = vpack.c.b16 %v640, %v639
        %v663 = vpack.c.b16 %v642, %v641
        %v664 = vpack.c.b16 %v644, %v643
        %v665 = vpack.c.b16 %v646, %v645
        %v666 = vpack.c.b16 %v648, %v647
        %v667 = vpack.c.b16 %v650, %v649
        %v668 = vpack.c.b16 %v652, %v651
        %685 = vmatprep.subr.bf16.mxu0 0
        %686 = vmatpush1.bf16.msra.mxu0 %v653
        %687 = vmatprep.subr.bf16.mxu0 0
        %688 = vmatpush1.bf16.msra.mxu0 %v654
        %689 = vmatprep.subr.bf16.mxu0 0
        %690 = vmatpush1.bf16.msra.mxu0 %v655
        %691 = vmatprep.subr.bf16.mxu0 0
        %692 = vmatpush1.bf16.msra.mxu0 %v656
        %693 = vmatprep.subr.bf16.mxu0 0
        %694 = vmatpush1.bf16.msra.mxu0 %v657
        %695 = vmatprep.subr.bf16.mxu0 0
        %696 = vmatpush1.bf16.msra.mxu0 %v658
        %697 = vmatprep.subr.bf16.mxu0 0
        %698 = vmatpush1.bf16.msra.mxu0 %v659
        %699 = vmatprep.subr.bf16.mxu0 0
        %700 = vmatpush1.bf16.msra.mxu0 %v660
        %701 = vmatprep.subr.bf16.mxu0 0
        %702 = vmatpush1.bf16.msra.mxu0 %v661
        %703 = vmatprep.subr.bf16.mxu0 0
        %704 = vmatpush1.bf16.msra.mxu0 %v662
        %705 = vmatprep.subr.bf16.mxu0 0
        %706 = vmatpush1.bf16.msra.mxu0 %v663
        %707 = vmatprep.subr.bf16.mxu0 0
        %708 = vmatpush1.bf16.msra.mxu0 %v664
        %709 = vmatprep.subr.bf16.mxu0 0
        %710 = vmatpush1.bf16.msra.mxu0 %v665
        %711 = vmatprep.subr.bf16.mxu0 0
        %712 = vmatpush1.bf16.msra.mxu0 %v666
        %713 = vmatprep.subr.bf16.mxu0 0
        %714 = vmatpush1.bf16.msra.mxu0 %v667
        %715 = vmatprep.subr.bf16.mxu0 0
        %716 = vmatpush1.bf16.msra.mxu0 %v668
        %717 = vmatprep.mubr.bf16.mxu0 %v519
        %718 = vmatmul.mubr.bf16.gmra.mrb[0].mxu0 %v518
        %v719 = vpop.f32.mrb[0].mxu0
        %v720 = vadd.f32 %v587, %v719
        %v721 = vpop.f32.mrb[0].mxu0
        %v722 = vpop.f32.mrb[0].mxu0
        %v723 = vadd.f32 %v587, %v722
        %v724 = vpop.f32.mrb[0].mxu0
        %725 = vmatprep.mubr.bf16.mxu0 %v521
        %726 = vmatmul.mubr.bf16.gmra.mrb[0].mxu0 %v520
        %v727 = vpop.f32.mrb[0].mxu0
        %v728 = vadd.f32 %v587, %v727
        %v729 = vpop.f32.mrb[0].mxu0
        %v730 = vpop.f32.mrb[0].mxu0
        %v731 = vadd.f32 %v587, %v730
        %v732 = vpop.f32.mrb[0].mxu0
        %733 = vmatprep.mubr.bf16.mxu0 %v523
        %734 = vmatmul.mubr.bf16.gmra.mrb[0].mxu0 %v522
        %v735 = vpop.f32.mrb[0].mxu0
        %v736 = vadd.f32 %v587, %v735
        %v737 = vpop.f32.mrb[0].mxu0
        %v738 = vpop.f32.mrb[0].mxu0
        %v739 = vadd.f32 %v587, %v738
        %v740 = vpop.f32.mrb[0].mxu0
        %741 = vmatprep.mubr.bf16.mxu0 %v525
        %742 = vmatmul.mubr.bf16.gmra.mrb[0].mxu0 %v524
        %v743 = vpop.f32.mrb[0].mxu0
        %v744 = vadd.f32 %v587, %v743
        %v745 = vpop.f32.mrb[0].mxu0
        %v746 = vpop.f32.mrb[0].mxu0
        %v747 = vadd.f32 %v587, %v746
        %v748 = vpop.f32.mrb[0].mxu0
        %749 = vmatprep.mubr.bf16.mxu0 %v527
        %750 = vmatmul.mubr.bf16.gmra.mrb[0].mxu0 %v526
        %v751 = vpop.f32.mrb[0].mxu0
        %v752 = vadd.f32 %v587, %v751
        %v753 = vpop.f32.mrb[0].mxu0
        %v754 = vpop.f32.mrb[0].mxu0
        %v755 = vadd.f32 %v587, %v754
        %v756 = vpop.f32.mrb[0].mxu0
        %757 = vmatprep.mubr.bf16.mxu0 %v529
        %758 = vmatmul.mubr.bf16.gmra.mrb[0].mxu0 %v528
        %v759 = vpop.f32.mrb[0].mxu0
        %v760 = vadd.f32 %v587, %v759
        %v761 = vpop.f32.mrb[0].mxu0
        %v762 = vpop.f32.mrb[0].mxu0
        %v763 = vadd.f32 %v587, %v762
        %v764 = vpop.f32.mrb[0].mxu0
        %765 = vmatprep.mubr.bf16.mxu0 %v531
        %766 = vmatmul.mubr.bf16.gmra.mrb[0].mxu0 %v530
        %v767 = vpop.f32.mrb[0].mxu0
        %v768 = vadd.f32 %v587, %v767
        %v769 = vpop.f32.mrb[0].mxu0
        %v770 = vpop.f32.mrb[0].mxu0
        %v771 = vadd.f32 %v587, %v770
        %v772 = vpop.f32.mrb[0].mxu0
        %773 = vmatprep.mubr.bf16.mxu0 %v533
        %774 = vmatmul.mubr.bf16.gmra.mrb[0].mxu0 %v532
        %v775 = vpop.f32.mrb[0].mxu0
        %v776 = vadd.f32 %v587, %v775
        %v777 = vpop.f32.mrb[0].mxu0
        %v778 = vpop.f32.mrb[0].mxu0
        %v779 = vadd.f32 %v587, %v778
        %v780 = vpop.f32.mrb[0].mxu0
        %781 = vmatprep.mubr.bf16.mxu0 %v535
        %782 = vmatmul.mubr.bf16.gmra.mrb[0].mxu0 %v534
        %v783 = vpop.f32.mrb[0].mxu0
        %v784 = vadd.f32 %v587, %v783
        %v785 = vpop.f32.mrb[0].mxu0
        %v786 = vpop.f32.mrb[0].mxu0
        %v787 = vadd.f32 %v587, %v786
        %v788 = vpop.f32.mrb[0].mxu0
        %789 = vmatprep.mubr.bf16.mxu0 %v537
        %790 = vmatmul.mubr.bf16.gmra.mrb[0].mxu0 %v536
        %v791 = vpop.f32.mrb[0].mxu0
        %v792 = vadd.f32 %v587, %v791
        %v793 = vpop.f32.mrb[0].mxu0
        %v794 = vpop.f32.mrb[0].mxu0
        %v795 = vadd.f32 %v587, %v794
        %v796 = vpop.f32.mrb[0].mxu0
        %797 = vmatprep.mubr.bf16.mxu0 %v539
        %798 = vmatmul.mubr.bf16.gmra.mrb[0].mxu0 %v538
        %v799 = vpop.f32.mrb[0].mxu0
        %v800 = vadd.f32 %v587, %v799
        %v801 = vpop.f32.mrb[0].mxu0
        %v802 = vpop.f32.mrb[0].mxu0
        %v803 = vadd.f32 %v587, %v802
        %v804 = vpop.f32.mrb[0].mxu0
        %805 = vmatprep.mubr.bf16.mxu0 %v541
        %806 = vmatmul.mubr.bf16.gmra.mrb[0].mxu0 %v540
        %v807 = vpop.f32.mrb[0].mxu0
        %v808 = vadd.f32 %v587, %v807
        %v809 = vpop.f32.mrb[0].mxu0
        %v810 = vpop.f32.mrb[0].mxu0
        %v811 = vadd.f32 %v587, %v810
        %v812 = vpop.f32.mrb[0].mxu0
        %813 = vmatprep.mubr.bf16.mxu0 %v543
        %814 = vmatmul.mubr.bf16.gmra.mrb[0].mxu0 %v542
        %v815 = vpop.f32.mrb[0].mxu0
        %v816 = vadd.f32 %v587, %v815
        %v817 = vpop.f32.mrb[0].mxu0
        %v818 = vpop.f32.mrb[0].mxu0
        %v819 = vadd.f32 %v587, %v818
        %v820 = vpop.f32.mrb[0].mxu0
        %821 = vmatprep.mubr.bf16.mxu0 %v545
        %822 = vmatmul.mubr.bf16.gmra.mrb[0].mxu0 %v544
        %v823 = vpop.f32.mrb[0].mxu0
        %v824 = vadd.f32 %v587, %v823
        %v825 = vpop.f32.mrb[0].mxu0
        %v826 = vpop.f32.mrb[0].mxu0
        %v827 = vadd.f32 %v587, %v826
        %v828 = vpop.f32.mrb[0].mxu0
        %829 = vmatprep.mubr.bf16.mxu0 %v547
        %830 = vmatmul.mubr.bf16.gmra.mrb[0].mxu0 %v546
        %v831 = vpop.f32.mrb[0].mxu0
        %v832 = vadd.f32 %v587, %v831
        %v833 = vpop.f32.mrb[0].mxu0
        %v834 = vpop.f32.mrb[0].mxu0
        %v835 = vadd.f32 %v587, %v834
        %v836 = vpop.f32.mrb[0].mxu0
        %837 = vmatprep.mubr.bf16.mxu0 %v549
        %838 = vmatmul.mubr.bf16.gmra.mrb[0].mxu0 %v548
        %v839 = vpop.f32.mrb[0].mxu0
        %v840 = vadd.f32 %v587, %v839
        %v841 = vpop.f32.mrb[0].mxu0
        %v842 = vpop.f32.mrb[0].mxu0
        %v843 = vadd.f32 %v587, %v842
        %v844 = vpop.f32.mrb[0].mxu0
        %845 = vdwg.mxu0
        %v846 = vmax.f32 %v720, 0.0
        %v847 = vmax.f32 %v723, 0.0
        %v848 = vmax.f32 %v728, 0.0
        %v849 = vmax.f32 %v731, 0.0
        %v850 = vmax.f32 %v736, 0.0
        %v851 = vmax.f32 %v739, 0.0
        %v852 = vmax.f32 %v744, 0.0
        %v853 = vmax.f32 %v747, 0.0
        %v854 = vmax.f32 %v752, 0.0
        %v855 = vmax.f32 %v755, 0.0
        %v856 = vmax.f32 %v760, 0.0
        %v857 = vmax.f32 %v763, 0.0
        %v858 = vmax.f32 %v768, 0.0
        %v859 = vmax.f32 %v771, 0.0
        %v860 = vmax.f32 %v776, 0.0
        %v861 = vmax.f32 %v779, 0.0
        %v862 = vmax.f32 %v784, 0.0
        %v863 = vmax.f32 %v787, 0.0
        %v864 = vmax.f32 %v792, 0.0
        %v865 = vmax.f32 %v795, 0.0
        %v866 = vmax.f32 %v800, 0.0
        %v867 = vmax.f32 %v803, 0.0
        %v868 = vmax.f32 %v808, 0.0
        %v869 = vmax.f32 %v811, 0.0
        %v870 = vmax.f32 %v816, 0.0
        %v871 = vmax.f32 %v819, 0.0
        %v872 = vmax.f32 %v824, 0.0
        %v873 = vmax.f32 %v827, 0.0
        %v874 = vmax.f32 %v832, 0.0
        %v875 = vmax.f32 %v835, 0.0
        %v876 = vmax.f32 %v840, 0.0
        %v877 = vmax.f32 %v843, 0.0
        %v878 = vpack.c.bf16 %v847, %v846
        %v879 = vpack.c.bf16 %v849, %v848
        %v880 = vpack.c.bf16 %v851, %v850
        %v881 = vpack.c.bf16 %v853, %v852
        %v882 = vpack.c.bf16 %v855, %v854
        %v883 = vpack.c.bf16 %v857, %v856
        %v884 = vpack.c.bf16 %v859, %v858
        %v885 = vpack.c.bf16 %v861, %v860
        %v886 = vpack.c.bf16 %v863, %v862
        %v887 = vpack.c.bf16 %v865, %v864
        %v888 = vpack.c.bf16 %v867, %v866
        %v889 = vpack.c.bf16 %v869, %v868
        %v890 = vpack.c.bf16 %v871, %v870
        %v891 = vpack.c.bf16 %v873, %v872
        %v892 = vpack.c.bf16 %v875, %v874
        %v893 = vpack.c.bf16 %v877, %v876
        %v894 = vld [vmem:[#allocation7] sm:$0xf]
        %v895 = vld [vmem:[#allocation7 + $0x4] sm:$0xf]
        %v896 = vld [vmem:[#allocation7 + $0x8] sm:$0xf]
        %v897 = vld [vmem:[#allocation7 + $0xc] sm:$0xf]
        %v898 = vld [vmem:[#allocation7 + $0x10] sm:$0xf]
        %v899 = vld [vmem:[#allocation7 + $0x14] sm:$0xf]
        %v900 = vld [vmem:[#allocation7 + $0x18] sm:$0xf]
        %v901 = vld [vmem:[#allocation7 + $0x1c] sm:$0xf]
        %v902 = vld [vmem:[#allocation7 + $0x20] sm:$0xf]
        %v903 = vld [vmem:[#allocation7 + $0x24] sm:$0xf]
        %v904 = vld [vmem:[#allocation7 + $0x28] sm:$0xf]
        %v905 = vld [vmem:[#allocation7 + $0x2c] sm:$0xf]
        %v906 = vld [vmem:[#allocation7 + $0x30] sm:$0xf]
        %v907 = vld [vmem:[#allocation7 + $0x34] sm:$0xf]
        %v908 = vld [vmem:[#allocation7 + $0x38] sm:$0xf]
        %v909 = vld [vmem:[#allocation7 + $0x3c] sm:$0xf]
        %v910 = vld [vmem:[%s4] sm:$0x1]
        %v912 = vlaneseq
        %v913 = vshrl.u32 %v912, 7
        %v914 = vsub.s32 0, %v913
        %v915 = vrot.slane %v910, %v914
        %v933 = vunpack.c.l.b16 %v894
        %v934 = vunpack.c.l.b16 %v895
        %v935 = vunpack.c.l.b16 %v896
        %v936 = vunpack.c.l.b16 %v897
        %v937 = vunpack.c.l.b16 %v898
        %v938 = vunpack.c.l.b16 %v899
        %v939 = vunpack.c.l.b16 %v900
        %v940 = vunpack.c.l.b16 %v901
        %v941 = vunpack.c.l.b16 %v902
        %v942 = vunpack.c.l.b16 %v903
        %v943 = vunpack.c.l.b16 %v904
        %v944 = vunpack.c.l.b16 %v905
        %v945 = vunpack.c.l.b16 %v906
        %v946 = vunpack.c.l.b16 %v907
        %v947 = vunpack.c.l.b16 %v908
        %v948 = vunpack.c.l.b16 %v909
        %v949 = vpack.c.b16 %v934, %v933
        %v950 = vpack.c.b16 %v936, %v935
        %v951 = vpack.c.b16 %v938, %v937
        %v952 = vpack.c.b16 %v940, %v939
        %v953 = vpack.c.b16 %v942, %v941
        %v954 = vpack.c.b16 %v944, %v943
        %v955 = vpack.c.b16 %v946, %v945
        %v956 = vpack.c.b16 %v948, %v947
        %965 = vmatprep.subr.bf16.mxu0 0
        %966 = vmatpush1.bf16.msra.mxu0 %v949
        %967 = vmatprep.subr.bf16.mxu0 0
        %968 = vmatpush1.bf16.msra.mxu0 %v950
        %969 = vmatprep.subr.bf16.mxu0 0
        %970 = vmatpush1.bf16.msra.mxu0 %v951
        %971 = vmatprep.subr.bf16.mxu0 0
        %972 = vmatpush1.bf16.msra.mxu0 %v952
        %973 = vmatprep.subr.bf16.mxu0 0
        %974 = vmatpush1.bf16.msra.mxu0 %v953
        %975 = vmatprep.subr.bf16.mxu0 0
        %976 = vmatpush1.bf16.msra.mxu0 %v954
        %977 = vmatprep.subr.bf16.mxu0 0
        %978 = vmatpush1.bf16.msra.mxu0 %v955
        %979 = vmatprep.subr.bf16.mxu0 0
        %980 = vmatpush1.bf16.msra.mxu0 %v956
        %981 = vmatprep.subr.bf16.mxu0 0
        %982 = vmatpush1.bf16.msra.mxu0 0
        %983 = vmatprep.subr.bf16.mxu0 0
        %984 = vmatpush1.bf16.msra.mxu0 0
        %985 = vmatprep.subr.bf16.mxu0 0
        %986 = vmatpush1.bf16.msra.mxu0 0
        %987 = vmatprep.subr.bf16.mxu0 0
        %988 = vmatpush1.bf16.msra.mxu0 0
        %989 = vmatprep.subr.bf16.mxu0 0
        %990 = vmatpush1.bf16.msra.mxu0 0
        %991 = vmatprep.subr.bf16.mxu0 0
        %992 = vmatpush1.bf16.msra.mxu0 0
        %993 = vmatprep.subr.bf16.mxu0 0
        %994 = vmatpush1.bf16.msra.mxu0 0
        %995 = vmatprep.subr.bf16.mxu0 0
        %996 = vmatpush1.bf16.msra.mxu0 0
        %997 = vmatprep.mubr.bf16.mxu0 0
        %998 = vmatmul.mubr.bf16.gmra.mrb[0].mxu0 %v878
        %v999 = vpop.f32.mrb[0].mxu0
        %v1000 = vadd.f32 %v915, %v999
        %v1001 = vpop.f32.mrb[0].mxu0
        %v1002 = vpop.f32.mrb[0].mxu0
        %v1003 = vadd.f32 %v915, %v1002
        %v1004 = vpop.f32.mrb[0].mxu0
        %1005 = vmatprep.mubr.bf16.mxu0 0
        %1006 = vmatmul.mubr.bf16.gmra.mrb[0].mxu0 %v879
        %v1007 = vpop.f32.mrb[0].mxu0
        %v1008 = vadd.f32 %v915, %v1007
        %v1009 = vpop.f32.mrb[0].mxu0
        %v1010 = vpop.f32.mrb[0].mxu0
        %v1011 = vadd.f32 %v915, %v1010
        %v1012 = vpop.f32.mrb[0].mxu0
        %1013 = vmatprep.mubr.bf16.mxu0 0
        %1014 = vmatmul.mubr.bf16.gmra.mrb[0].mxu0 %v880
        %v1015 = vpop.f32.mrb[0].mxu0
        %v1016 = vadd.f32 %v915, %v1015
        %v1017 = vpop.f32.mrb[0].mxu0
        %v1018 = vpop.f32.mrb[0].mxu0
        %v1019 = vadd.f32 %v915, %v1018
        %v1020 = vpop.f32.mrb[0].mxu0
        %1021 = vmatprep.mubr.bf16.mxu0 0
        %1022 = vmatmul.mubr.bf16.gmra.mrb[0].mxu0 %v881
        %v1023 = vpop.f32.mrb[0].mxu0
        %v1024 = vadd.f32 %v915, %v1023
        %v1025 = vpop.f32.mrb[0].mxu0
        %v1026 = vpop.f32.mrb[0].mxu0
        %v1027 = vadd.f32 %v915, %v1026
        %v1028 = vpop.f32.mrb[0].mxu0
        %1029 = vmatprep.mubr.bf16.mxu0 0
        %1030 = vmatmul.mubr.bf16.gmra.mrb[0].mxu0 %v882
        %v1031 = vpop.f32.mrb[0].mxu0
        %v1032 = vadd.f32 %v915, %v1031
        %v1033 = vpop.f32.mrb[0].mxu0
        %v1034 = vpop.f32.mrb[0].mxu0
        %v1035 = vadd.f32 %v915, %v1034
        %v1036 = vpop.f32.mrb[0].mxu0
        %1037 = vmatprep.mubr.bf16.mxu0 0
        %1038 = vmatmul.mubr.bf16.gmra.mrb[0].mxu0 %v883
        %v1039 = vpop.f32.mrb[0].mxu0
        %v1040 = vadd.f32 %v915, %v1039
        %v1041 = vpop.f32.mrb[0].mxu0
        %v1042 = vpop.f32.mrb[0].mxu0
        %v1043 = vadd.f32 %v915, %v1042
        %v1044 = vpop.f32.mrb[0].mxu0
        %1045 = vmatprep.mubr.bf16.mxu0 0
        %1046 = vmatmul.mubr.bf16.gmra.mrb[0].mxu0 %v884
        %v1047 = vpop.f32.mrb[0].mxu0
        %v1048 = vadd.f32 %v915, %v1047
        %v1049 = vpop.f32.mrb[0].mxu0
        %v1050 = vpop.f32.mrb[0].mxu0
        %v1051 = vadd.f32 %v915, %v1050
        %v1052 = vpop.f32.mrb[0].mxu0
        %1053 = vmatprep.mubr.bf16.mxu0 0
        %1054 = vmatmul.mubr.bf16.gmra.mrb[0].mxu0 %v885
        %v1055 = vpop.f32.mrb[0].mxu0
        %v1056 = vadd.f32 %v915, %v1055
        %v1057 = vpop.f32.mrb[0].mxu0
        %v1058 = vpop.f32.mrb[0].mxu0
        %v1059 = vadd.f32 %v915, %v1058
        %v1060 = vpop.f32.mrb[0].mxu0
        %1061 = vmatprep.mubr.bf16.mxu0 0
        %1062 = vmatmul.mubr.bf16.gmra.mrb[0].mxu0 %v886
        %v1063 = vpop.f32.mrb[0].mxu0
        %v1064 = vadd.f32 %v915, %v1063
        %v1065 = vpop.f32.mrb[0].mxu0
        %v1066 = vpop.f32.mrb[0].mxu0
        %v1067 = vadd.f32 %v915, %v1066
        %v1068 = vpop.f32.mrb[0].mxu0
        %1069 = vmatprep.mubr.bf16.mxu0 0
        %1070 = vmatmul.mubr.bf16.gmra.mrb[0].mxu0 %v887
        %v1071 = vpop.f32.mrb[0].mxu0
        %v1072 = vadd.f32 %v915, %v1071
        %v1073 = vpop.f32.mrb[0].mxu0
        %v1074 = vpop.f32.mrb[0].mxu0
        %v1075 = vadd.f32 %v915, %v1074
        %v1076 = vpop.f32.mrb[0].mxu0
        %1077 = vmatprep.mubr.bf16.mxu0 0
        %1078 = vmatmul.mubr.bf16.gmra.mrb[0].mxu0 %v888
        %v1079 = vpop.f32.mrb[0].mxu0
        %v1080 = vadd.f32 %v915, %v1079
        %v1081 = vpop.f32.mrb[0].mxu0
        %v1082 = vpop.f32.mrb[0].mxu0
        %v1083 = vadd.f32 %v915, %v1082
        %v1084 = vpop.f32.mrb[0].mxu0
        %1085 = vmatprep.mubr.bf16.mxu0 0
        %1086 = vmatmul.mubr.bf16.gmra.mrb[0].mxu0 %v889
        %v1087 = vpop.f32.mrb[0].mxu0
        %v1088 = vadd.f32 %v915, %v1087
        %v1089 = vpop.f32.mrb[0].mxu0
        %v1090 = vpop.f32.mrb[0].mxu0
        %v1091 = vadd.f32 %v915, %v1090
        %v1092 = vpop.f32.mrb[0].mxu0
        %1093 = vmatprep.mubr.bf16.mxu0 0
        %1094 = vmatmul.mubr.bf16.gmra.mrb[0].mxu0 %v890
        %v1095 = vpop.f32.mrb[0].mxu0
        %v1096 = vadd.f32 %v915, %v1095
        %v1097 = vpop.f32.mrb[0].mxu0
        %v1098 = vpop.f32.mrb[0].mxu0
        %v1099 = vadd.f32 %v915, %v1098
        %v1100 = vpop.f32.mrb[0].mxu0
        %1101 = vmatprep.mubr.bf16.mxu0 0
        %1102 = vmatmul.mubr.bf16.gmra.mrb[0].mxu0 %v891
        %v1103 = vpop.f32.mrb[0].mxu0
        %v1104 = vadd.f32 %v915, %v1103
        %v1105 = vpop.f32.mrb[0].mxu0
        %v1106 = vpop.f32.mrb[0].mxu0
        %v1107 = vadd.f32 %v915, %v1106
        %v1108 = vpop.f32.mrb[0].mxu0
        %1109 = vmatprep.mubr.bf16.mxu0 0
        %1110 = vmatmul.mubr.bf16.gmra.mrb[0].mxu0 %v892
        %v1111 = vpop.f32.mrb[0].mxu0
        %v1112 = vadd.f32 %v915, %v1111
        %v1113 = vpop.f32.mrb[0].mxu0
        %v1114 = vpop.f32.mrb[0].mxu0
        %v1115 = vadd.f32 %v915, %v1114
        %v1116 = vpop.f32.mrb[0].mxu0
        %1117 = vmatprep.mubr.bf16.mxu0 0
        %1118 = vmatmul.mubr.bf16.gmra.mrb[0].mxu0 %v893
        %v1119 = vpop.f32.mrb[0].mxu0
        %v1120 = vadd.f32 %v915, %v1119
        %v1121 = vpop.f32.mrb[0].mxu0
        %v1122 = vpop.f32.mrb[0].mxu0
        %v1123 = vadd.f32 %v915, %v1122
        %v1124 = vpop.f32.mrb[0].mxu0
        %1125 = vdwg.mxu0
        %v1126 = vpack.c.bf16 %v1003, %v1000
        %v1127 = vpack.c.bf16 %v1011, %v1008
        %v1128 = vpack.c.bf16 %v1019, %v1016
        %v1129 = vpack.c.bf16 %v1027, %v1024
        %v1130 = vpack.c.bf16 %v1035, %v1032
        %v1131 = vpack.c.bf16 %v1043, %v1040
        %v1132 = vpack.c.bf16 %v1051, %v1048
        %v1133 = vpack.c.bf16 %v1059, %v1056
        %v1134 = vpack.c.bf16 %v1067, %v1064
        %v1135 = vpack.c.bf16 %v1075, %v1072
        %v1136 = vpack.c.bf16 %v1083, %v1080
        %v1137 = vpack.c.bf16 %v1091, %v1088
        %v1138 = vpack.c.bf16 %v1099, %v1096
        %v1139 = vpack.c.bf16 %v1107, %v1104
        %v1140 = vpack.c.bf16 %v1115, %v1112
        %v1141 = vpack.c.bf16 %v1123, %v1120
        %v1158 = vunpack.c.l.b16 %v1126
        %v1159 = vunpack.c.h.b16 %v1126
        %v1160 = vunpack.c.l.b16 %v1127
        %v1161 = vunpack.c.h.b16 %v1127
        %v1162 = vunpack.c.l.b16 %v1128
        %v1163 = vunpack.c.h.b16 %v1128
        %v1164 = vunpack.c.l.b16 %v1129
        %v1165 = vunpack.c.h.b16 %v1129
        %v1166 = vunpack.c.l.b16 %v1130
        %v1167 = vunpack.c.h.b16 %v1130
        %v1168 = vunpack.c.l.b16 %v1131
        %v1169 = vunpack.c.h.b16 %v1131
        %v1170 = vunpack.c.l.b16 %v1132
        %v1171 = vunpack.c.h.b16 %v1132
        %v1172 = vunpack.c.l.b16 %v1133
        %v1173 = vunpack.c.h.b16 %v1133
        %v1174 = vunpack.c.l.b16 %v1134
        %v1175 = vunpack.c.h.b16 %v1134
        %v1176 = vunpack.c.l.b16 %v1135
        %v1177 = vunpack.c.h.b16 %v1135
        %v1178 = vunpack.c.l.b16 %v1136
        %v1179 = vunpack.c.h.b16 %v1136
        %v1180 = vunpack.c.l.b16 %v1137
        %v1181 = vunpack.c.h.b16 %v1137
        %v1182 = vunpack.c.l.b16 %v1138
        %v1183 = vunpack.c.h.b16 %v1138
        %v1184 = vunpack.c.l.b16 %v1139
        %v1185 = vunpack.c.h.b16 %v1139
        %v1186 = vunpack.c.l.b16 %v1140
        %v1187 = vunpack.c.h.b16 %v1140
        %v1188 = vunpack.c.l.b16 %v1141
        %v1189 = vunpack.c.h.b16 %v1141
        %v1190 = vpack.c.b16 %v1158, %v1158
        %v1191 = vpack.c.b16 %v1159, %v1159
        %v1192 = vpack.c.b16 %v1160, %v1160
        %v1193 = vpack.c.b16 %v1161, %v1161
        %v1194 = vpack.c.b16 %v1162, %v1162
        %v1195 = vpack.c.b16 %v1163, %v1163
        %v1196 = vpack.c.b16 %v1164, %v1164
        %v1197 = vpack.c.b16 %v1165, %v1165
        %v1198 = vpack.c.b16 %v1166, %v1166
        %v1199 = vpack.c.b16 %v1167, %v1167
        %v1200 = vpack.c.b16 %v1168, %v1168
        %v1201 = vpack.c.b16 %v1169, %v1169
        %v1202 = vpack.c.b16 %v1170, %v1170
        %v1203 = vpack.c.b16 %v1171, %v1171
        %v1204 = vpack.c.b16 %v1172, %v1172
        %v1205 = vpack.c.b16 %v1173, %v1173
        %v1206 = vpack.c.b16 %v1174, %v1174
        %v1207 = vpack.c.b16 %v1175, %v1175
        %v1208 = vpack.c.b16 %v1176, %v1176
        %v1209 = vpack.c.b16 %v1177, %v1177
        %v1210 = vpack.c.b16 %v1178, %v1178
        %v1211 = vpack.c.b16 %v1179, %v1179
        %v1212 = vpack.c.b16 %v1180, %v1180
        %v1213 = vpack.c.b16 %v1181, %v1181
        %v1214 = vpack.c.b16 %v1182, %v1182
        %v1215 = vpack.c.b16 %v1183, %v1183
        %v1216 = vpack.c.b16 %v1184, %v1184
        %v1217 = vpack.c.b16 %v1185, %v1185
        %v1218 = vpack.c.b16 %v1186, %v1186
        %v1219 = vpack.c.b16 %v1187, %v1187
        %v1220 = vpack.c.b16 %v1188, %v1188
        %v1221 = vpack.c.b16 %v1189, %v1189
        %1254 = vst [vmem:[%s450] sm:$0xf] %v1190
        %1255 = vst [vmem:[%s450 + $0x4] sm:$0xf] %v1191
        %1256 = vst [vmem:[%s450 + $0x8] sm:$0xf] %v1192
        %1257 = vst [vmem:[%s450 + $0xc] sm:$0xf] %v1193
        %1258 = vst [vmem:[%s450 + $0x10] sm:$0xf] %v1194
        %1259 = vst [vmem:[%s450 + $0x14] sm:$0xf] %v1195
        %1260 = vst [vmem:[%s450 + $0x18] sm:$0xf] %v1196
        %1261 = vst [vmem:[%s450 + $0x1c] sm:$0xf] %v1197
        %1262 = vst [vmem:[%s450 + $0x20] sm:$0xf] %v1198
        %1263 = vst [vmem:[%s450 + $0x24] sm:$0xf] %v1199
        %1264 = vst [vmem:[%s450 + $0x28] sm:$0xf] %v1200
        %1265 = vst [vmem:[%s450 + $0x2c] sm:$0xf] %v1201
        %1266 = vst [vmem:[%s450 + $0x30] sm:$0xf] %v1202
        %1267 = vst [vmem:[%s450 + $0x34] sm:$0xf] %v1203
        %1268 = vst [vmem:[%s450 + $0x38] sm:$0xf] %v1204
        %1269 = vst [vmem:[%s450 + $0x3c] sm:$0xf] %v1205
        %1270 = vst [vmem:[%s450 + $0x40] sm:$0xf] %v1206
        %1271 = vst [vmem:[%s450 + $0x44] sm:$0xf] %v1207
        %1272 = vst [vmem:[%s450 + $0x48] sm:$0xf] %v1208
        %1273 = vst [vmem:[%s450 + $0x4c] sm:$0xf] %v1209
        %1274 = vst [vmem:[%s450 + $0x50] sm:$0xf] %v1210
        %1275 = vst [vmem:[%s450 + $0x54] sm:$0xf] %v1211
        %1276 = vst [vmem:[%s450 + $0x58] sm:$0xf] %v1212
        %1277 = vst [vmem:[%s450 + $0x5c] sm:$0xf] %v1213
        %1278 = vst [vmem:[%s450 + $0x60] sm:$0xf] %v1214
        %1279 = vst [vmem:[%s450 + $0x64] sm:$0xf] %v1215
        %1280 = vst [vmem:[%s450 + $0x68] sm:$0xf] %v1216
        %1281 = vst [vmem:[%s450 + $0x6c] sm:$0xf] %v1217
        %1282 = vst [vmem:[%s450 + $0x70] sm:$0xf] %v1218
        %1283 = vst [vmem:[%s450 + $0x74] sm:$0xf] %v1219
        %1284 = vst [vmem:[%s450 + $0x78] sm:$0xf] %v1220
        %1285 = vst [vmem:[%s450 + $0x7c] sm:$0xf] %v1221
        %v1286 = vld [vmem:[#allocation8] sm:$0xf]
        %v1287 = vld [vmem:[#allocation8 + $0x4] sm:$0xf]
        %v1288 = vld [vmem:[#allocation8 + $0x8] sm:$0xf]
        %v1289 = vld [vmem:[#allocation8 + $0xc] sm:$0xf]
        %v1290 = vld [vmem:[#allocation8 + $0x10] sm:$0xf]
        %v1291 = vld [vmem:[#allocation8 + $0x14] sm:$0xf]
        %v1292 = vld [vmem:[#allocation8 + $0x18] sm:$0xf]
        %v1293 = vld [vmem:[#allocation8 + $0x1c] sm:$0xf]
        %v1294 = vld [vmem:[#allocation8 + $0x20] sm:$0xf]
        %v1295 = vld [vmem:[#allocation8 + $0x24] sm:$0xf]
        %v1296 = vld [vmem:[#allocation8 + $0x28] sm:$0xf]
        %v1297 = vld [vmem:[#allocation8 + $0x2c] sm:$0xf]
        %v1298 = vld [vmem:[#allocation8 + $0x30] sm:$0xf]
        %v1299 = vld [vmem:[#allocation8 + $0x34] sm:$0xf]
        %v1300 = vld [vmem:[#allocation8 + $0x38] sm:$0xf]
        %v1301 = vld [vmem:[#allocation8 + $0x3c] sm:$0xf]
        %v1302 = vld [vmem:[%s6] sm:$0x1]
        %v1304 = vlaneseq
        %v1305 = vshrl.u32 %v1304, 7
        %v1306 = vsub.s32 0, %v1305
        %v1307 = vrot.slane %v1302, %v1306
        %v1325 = vunpack.c.l.b16 %v1286
        %v1326 = vunpack.c.l.b16 %v1287
        %v1327 = vunpack.c.l.b16 %v1288
        %v1328 = vunpack.c.l.b16 %v1289
        %v1329 = vunpack.c.l.b16 %v1290
        %v1330 = vunpack.c.l.b16 %v1291
        %v1331 = vunpack.c.l.b16 %v1292
        %v1332 = vunpack.c.l.b16 %v1293
        %v1333 = vunpack.c.l.b16 %v1294
        %v1334 = vunpack.c.l.b16 %v1295
        %v1335 = vunpack.c.l.b16 %v1296
        %v1336 = vunpack.c.l.b16 %v1297
        %v1337 = vunpack.c.l.b16 %v1298
        %v1338 = vunpack.c.l.b16 %v1299
        %v1339 = vunpack.c.l.b16 %v1300
        %v1340 = vunpack.c.l.b16 %v1301
        %v1341 = vpack.c.b16 %v1326, %v1325
        %v1342 = vpack.c.b16 %v1328, %v1327
        %v1343 = vpack.c.b16 %v1330, %v1329
        %v1344 = vpack.c.b16 %v1332, %v1331
        %v1345 = vpack.c.b16 %v1334, %v1333
        %v1346 = vpack.c.b16 %v1336, %v1335
        %v1347 = vpack.c.b16 %v1338, %v1337
        %v1348 = vpack.c.b16 %v1340, %v1339
        %1357 = vmatprep.subr.bf16.mxu0 0
        %1358 = vmatpush1.bf16.msra.mxu0 %v1341
        %1359 = vmatprep.subr.bf16.mxu0 0
        %1360 = vmatpush1.bf16.msra.mxu0 %v1342
        %1361 = vmatprep.subr.bf16.mxu0 0
        %1362 = vmatpush1.bf16.msra.mxu0 %v1343
        %1363 = vmatprep.subr.bf16.mxu0 0
        %1364 = vmatpush1.bf16.msra.mxu0 %v1344
        %1365 = vmatprep.subr.bf16.mxu0 0
        %1366 = vmatpush1.bf16.msra.mxu0 %v1345
        %1367 = vmatprep.subr.bf16.mxu0 0
        %1368 = vmatpush1.bf16.msra.mxu0 %v1346
        %1369 = vmatprep.subr.bf16.mxu0 0
        %1370 = vmatpush1.bf16.msra.mxu0 %v1347
        %1371 = vmatprep.subr.bf16.mxu0 0
        %1372 = vmatpush1.bf16.msra.mxu0 %v1348
        %1373 = vmatprep.subr.bf16.mxu0 0
        %1374 = vmatpush1.bf16.msra.mxu0 0
        %1375 = vmatprep.subr.bf16.mxu0 0
        %1376 = vmatpush1.bf16.msra.mxu0 0
        %1377 = vmatprep.subr.bf16.mxu0 0
        %1378 = vmatpush1.bf16.msra.mxu0 0
        %1379 = vmatprep.subr.bf16.mxu0 0
        %1380 = vmatpush1.bf16.msra.mxu0 0
        %1381 = vmatprep.subr.bf16.mxu0 0
        %1382 = vmatpush1.bf16.msra.mxu0 0
        %1383 = vmatprep.subr.bf16.mxu0 0
        %1384 = vmatpush1.bf16.msra.mxu0 0
        %1385 = vmatprep.subr.bf16.mxu0 0
        %1386 = vmatpush1.bf16.msra.mxu0 0
        %1387 = vmatprep.subr.bf16.mxu0 0
        %1388 = vmatpush1.bf16.msra.mxu0 0
        %1389 = vmatprep.mubr.bf16.mxu0 0
        %1390 = vmatmul.mubr.bf16.gmra.mrb[0].mxu0 %v1126
        %v1391 = vpop.f32.mrb[0].mxu0
        %v1392 = vadd.f32 %v1307, %v1391
        %v1393 = vpop.f32.mrb[0].mxu0
        %v1394 = vpop.f32.mrb[0].mxu0
        %v1395 = vadd.f32 %v1307, %v1394
        %v1396 = vpop.f32.mrb[0].mxu0
        %1397 = vmatprep.mubr.bf16.mxu0 0
        %1398 = vmatmul.mubr.bf16.gmra.mrb[0].mxu0 %v1127
        %v1399 = vpop.f32.mrb[0].mxu0
        %v1400 = vadd.f32 %v1307, %v1399
        %v1401 = vpop.f32.mrb[0].mxu0
        %v1402 = vpop.f32.mrb[0].mxu0
        %v1403 = vadd.f32 %v1307, %v1402
        %v1404 = vpop.f32.mrb[0].mxu0
        %1405 = vmatprep.mubr.bf16.mxu0 0
        %1406 = vmatmul.mubr.bf16.gmra.mrb[0].mxu0 %v1128
        %v1407 = vpop.f32.mrb[0].mxu0
        %v1408 = vadd.f32 %v1307, %v1407
        %v1409 = vpop.f32.mrb[0].mxu0
        %v1410 = vpop.f32.mrb[0].mxu0
        %v1411 = vadd.f32 %v1307, %v1410
        %v1412 = vpop.f32.mrb[0].mxu0
        %1413 = vmatprep.mubr.bf16.mxu0 0
        %1414 = vmatmul.mubr.bf16.gmra.mrb[0].mxu0 %v1129
        %v1415 = vpop.f32.mrb[0].mxu0
        %v1416 = vadd.f32 %v1307, %v1415
        %v1417 = vpop.f32.mrb[0].mxu0
        %v1418 = vpop.f32.mrb[0].mxu0
        %v1419 = vadd.f32 %v1307, %v1418
        %v1420 = vpop.f32.mrb[0].mxu0
        %1421 = vmatprep.mubr.bf16.mxu0 0
        %1422 = vmatmul.mubr.bf16.gmra.mrb[0].mxu0 %v1130
        %v1423 = vpop.f32.mrb[0].mxu0
        %v1424 = vadd.f32 %v1307, %v1423
        %v1425 = vpop.f32.mrb[0].mxu0
        %v1426 = vpop.f32.mrb[0].mxu0
        %v1427 = vadd.f32 %v1307, %v1426
        %v1428 = vpop.f32.mrb[0].mxu0
        %1429 = vmatprep.mubr.bf16.mxu0 0
        %1430 = vmatmul.mubr.bf16.gmra.mrb[0].mxu0 %v1131
        %v1431 = vpop.f32.mrb[0].mxu0
        %v1432 = vadd.f32 %v1307, %v1431
        %v1433 = vpop.f32.mrb[0].mxu0
        %v1434 = vpop.f32.mrb[0].mxu0
        %v1435 = vadd.f32 %v1307, %v1434
        %v1436 = vpop.f32.mrb[0].mxu0
        %1437 = vmatprep.mubr.bf16.mxu0 0
        %1438 = vmatmul.mubr.bf16.gmra.mrb[0].mxu0 %v1132
        %v1439 = vpop.f32.mrb[0].mxu0
        %v1440 = vadd.f32 %v1307, %v1439
        %v1441 = vpop.f32.mrb[0].mxu0
        %v1442 = vpop.f32.mrb[0].mxu0
        %v1443 = vadd.f32 %v1307, %v1442
        %v1444 = vpop.f32.mrb[0].mxu0
        %1445 = vmatprep.mubr.bf16.mxu0 0
        %1446 = vmatmul.mubr.bf16.gmra.mrb[0].mxu0 %v1133
        %v1447 = vpop.f32.mrb[0].mxu0
        %v1448 = vadd.f32 %v1307, %v1447
        %v1449 = vpop.f32.mrb[0].mxu0
        %v1450 = vpop.f32.mrb[0].mxu0
        %v1451 = vadd.f32 %v1307, %v1450
        %v1452 = vpop.f32.mrb[0].mxu0
        %1453 = vmatprep.mubr.bf16.mxu0 0
        %1454 = vmatmul.mubr.bf16.gmra.mrb[0].mxu0 %v1134
        %v1455 = vpop.f32.mrb[0].mxu0
        %v1456 = vadd.f32 %v1307, %v1455
        %v1457 = vpop.f32.mrb[0].mxu0
        %v1458 = vpop.f32.mrb[0].mxu0
        %v1459 = vadd.f32 %v1307, %v1458
        %v1460 = vpop.f32.mrb[0].mxu0
        %1461 = vmatprep.mubr.bf16.mxu0 0
        %1462 = vmatmul.mubr.bf16.gmra.mrb[0].mxu0 %v1135
        %v1463 = vpop.f32.mrb[0].mxu0
        %v1464 = vadd.f32 %v1307, %v1463
        %v1465 = vpop.f32.mrb[0].mxu0
        %v1466 = vpop.f32.mrb[0].mxu0
        %v1467 = vadd.f32 %v1307, %v1466
        %v1468 = vpop.f32.mrb[0].mxu0
        %1469 = vmatprep.mubr.bf16.mxu0 0
        %1470 = vmatmul.mubr.bf16.gmra.mrb[0].mxu0 %v1136
        %v1471 = vpop.f32.mrb[0].mxu0
        %v1472 = vadd.f32 %v1307, %v1471
        %v1473 = vpop.f32.mrb[0].mxu0
        %v1474 = vpop.f32.mrb[0].mxu0
        %v1475 = vadd.f32 %v1307, %v1474
        %v1476 = vpop.f32.mrb[0].mxu0
        %1477 = vmatprep.mubr.bf16.mxu0 0
        %1478 = vmatmul.mubr.bf16.gmra.mrb[0].mxu0 %v1137
        %v1479 = vpop.f32.mrb[0].mxu0
        %v1480 = vadd.f32 %v1307, %v1479
        %v1481 = vpop.f32.mrb[0].mxu0
        %v1482 = vpop.f32.mrb[0].mxu0
        %v1483 = vadd.f32 %v1307, %v1482
        %v1484 = vpop.f32.mrb[0].mxu0
        %1485 = vmatprep.mubr.bf16.mxu0 0
        %1486 = vmatmul.mubr.bf16.gmra.mrb[0].mxu0 %v1138
        %v1487 = vpop.f32.mrb[0].mxu0
        %v1488 = vadd.f32 %v1307, %v1487
        %v1489 = vpop.f32.mrb[0].mxu0
        %v1490 = vpop.f32.mrb[0].mxu0
        %v1491 = vadd.f32 %v1307, %v1490
        %v1492 = vpop.f32.mrb[0].mxu0
        %1493 = vmatprep.mubr.bf16.mxu0 0
        %1494 = vmatmul.mubr.bf16.gmra.mrb[0].mxu0 %v1139
        %v1495 = vpop.f32.mrb[0].mxu0
        %v1496 = vadd.f32 %v1307, %v1495
        %v1497 = vpop.f32.mrb[0].mxu0
        %v1498 = vpop.f32.mrb[0].mxu0
        %v1499 = vadd.f32 %v1307, %v1498
        %v1500 = vpop.f32.mrb[0].mxu0
        %1501 = vmatprep.mubr.bf16.mxu0 0
        %1502 = vmatmul.mubr.bf16.gmra.mrb[0].mxu0 %v1140
        %v1503 = vpop.f32.mrb[0].mxu0
        %v1504 = vadd.f32 %v1307, %v1503
        %v1505 = vpop.f32.mrb[0].mxu0
        %v1506 = vpop.f32.mrb[0].mxu0
        %v1507 = vadd.f32 %v1307, %v1506
        %v1508 = vpop.f32.mrb[0].mxu0
        %1509 = vmatprep.mubr.bf16.mxu0 0
        %1510 = vmatmul.mubr.bf16.gmra.mrb[0].mxu0 %v1141
        %v1511 = vpop.f32.mrb[0].mxu0
        %v1512 = vadd.f32 %v1307, %v1511
        %v1513 = vpop.f32.mrb[0].mxu0
        %v1514 = vpop.f32.mrb[0].mxu0
        %v1515 = vadd.f32 %v1307, %v1514
        %v1516 = vpop.f32.mrb[0].mxu0
        %1517 = vdwg.mxu0
        %v1518 = vmax.f32 %v1392, 0.0
        %v1519 = vmax.f32 %v1395, 0.0
        %v1520 = vmax.f32 %v1400, 0.0
        %v1521 = vmax.f32 %v1403, 0.0
        %v1522 = vmax.f32 %v1408, 0.0
        %v1523 = vmax.f32 %v1411, 0.0
        %v1524 = vmax.f32 %v1416, 0.0
        %v1525 = vmax.f32 %v1419, 0.0
        %v1526 = vmax.f32 %v1424, 0.0
        %v1527 = vmax.f32 %v1427, 0.0
        %v1528 = vmax.f32 %v1432, 0.0
        %v1529 = vmax.f32 %v1435, 0.0
        %v1530 = vmax.f32 %v1440, 0.0
        %v1531 = vmax.f32 %v1443, 0.0
        %v1532 = vmax.f32 %v1448, 0.0
        %v1533 = vmax.f32 %v1451, 0.0
        %v1534 = vmax.f32 %v1456, 0.0
        %v1535 = vmax.f32 %v1459, 0.0
        %v1536 = vmax.f32 %v1464, 0.0
        %v1537 = vmax.f32 %v1467, 0.0
        %v1538 = vmax.f32 %v1472, 0.0
        %v1539 = vmax.f32 %v1475, 0.0
        %v1540 = vmax.f32 %v1480, 0.0
        %v1541 = vmax.f32 %v1483, 0.0
        %v1542 = vmax.f32 %v1488, 0.0
        %v1543 = vmax.f32 %v1491, 0.0
        %v1544 = vmax.f32 %v1496, 0.0
        %v1545 = vmax.f32 %v1499, 0.0
        %v1546 = vmax.f32 %v1504, 0.0
        %v1547 = vmax.f32 %v1507, 0.0
        %v1548 = vmax.f32 %v1512, 0.0
        %v1549 = vmax.f32 %v1515, 0.0
        %v1550 = vpack.c.bf16 %v1519, %v1518
        %v1551 = vpack.c.bf16 %v1521, %v1520
        %v1552 = vpack.c.bf16 %v1523, %v1522
        %v1553 = vpack.c.bf16 %v1525, %v1524
        %v1554 = vpack.c.bf16 %v1527, %v1526
        %v1555 = vpack.c.bf16 %v1529, %v1528
        %v1556 = vpack.c.bf16 %v1531, %v1530
        %v1557 = vpack.c.bf16 %v1533, %v1532
        %v1558 = vpack.c.bf16 %v1535, %v1534
        %v1559 = vpack.c.bf16 %v1537, %v1536
        %v1560 = vpack.c.bf16 %v1539, %v1538
        %v1561 = vpack.c.bf16 %v1541, %v1540
        %v1562 = vpack.c.bf16 %v1543, %v1542
        %v1563 = vpack.c.bf16 %v1545, %v1544
        %v1564 = vpack.c.bf16 %v1547, %v1546
        %v1565 = vpack.c.bf16 %v1549, %v1548
        %v1566 = vld [vmem:[#allocation10] sm:$0xff]
        %v1567 = vld [vmem:[#allocation10 + $0x8] sm:$0xff]
        %v1568 = vld [vmem:[#allocation10 + $0x10] sm:$0xff]
        %v1569 = vld [vmem:[#allocation10 + $0x18] sm:$0xff]
        %v1570 = vld [vmem:[#allocation10 + $0x20] sm:$0xff]
        %v1571 = vld [vmem:[#allocation10 + $0x28] sm:$0xff]
        %v1572 = vld [vmem:[#allocation10 + $0x30] sm:$0xff]
        %v1573 = vld [vmem:[#allocation10 + $0x38] sm:$0xff]
        %v1574 = vld [vmem:[#allocation10 + $0x40] sm:$0xff]
        %v1575 = vld [vmem:[#allocation10 + $0x48] sm:$0xff]
        %v1576 = vld [vmem:[#allocation10 + $0x50] sm:$0xff]
        %v1577 = vld [vmem:[#allocation10 + $0x58] sm:$0xff]
        %v1578 = vld [vmem:[#allocation10 + $0x60] sm:$0xff]
        %v1579 = vld [vmem:[#allocation10 + $0x68] sm:$0xff]
        %v1580 = vld [vmem:[#allocation10 + $0x70] sm:$0xff]
        %v1581 = vld [vmem:[#allocation10 + $0x78] sm:$0xff]
        %v1582 = vld [vmem:[%s8] sm:$0x3]
        %v1584 = vlaneseq
        %v1585 = vshrl.u32 %v1584, 7
        %v1586 = vsub.s32 0, %v1585
        %v1587 = vrot.slane %v1582, %v1586
        %v1588 = vlaneseq
        %v1589 = vshrl.u32 %v1588, 7
        %v1590 = vsub.s32 1, %v1589
        %v1591 = vrot.slane %v1582, %v1590
        %v1610 = vunpack.c.l.b16 %v1566
        %v1611 = vunpack.c.h.b16 %v1566
        %v1612 = vunpack.c.l.b16 %v1567
        %v1613 = vunpack.c.h.b16 %v1567
        %v1614 = vunpack.c.l.b16 %v1568
        %v1615 = vunpack.c.h.b16 %v1568
        %v1616 = vunpack.c.l.b16 %v1569
        %v1617 = vunpack.c.h.b16 %v1569
        %v1618 = vunpack.c.l.b16 %v1570
        %v1619 = vunpack.c.h.b16 %v1570
        %v1620 = vunpack.c.l.b16 %v1571
        %v1621 = vunpack.c.h.b16 %v1571
        %v1622 = vunpack.c.l.b16 %v1572
        %v1623 = vunpack.c.h.b16 %v1572
        %v1624 = vunpack.c.l.b16 %v1573
        %v1625 = vunpack.c.h.b16 %v1573
        %v1626 = vunpack.c.l.b16 %v1574
        %v1627 = vunpack.c.h.b16 %v1574
        %v1628 = vunpack.c.l.b16 %v1575
        %v1629 = vunpack.c.h.b16 %v1575
        %v1630 = vunpack.c.l.b16 %v1576
        %v1631 = vunpack.c.h.b16 %v1576
        %v1632 = vunpack.c.l.b16 %v1577
        %v1633 = vunpack.c.h.b16 %v1577
        %v1634 = vunpack.c.l.b16 %v1578
        %v1635 = vunpack.c.h.b16 %v1578
        %v1636 = vunpack.c.l.b16 %v1579
        %v1637 = vunpack.c.h.b16 %v1579
        %v1638 = vunpack.c.l.b16 %v1580
        %v1639 = vunpack.c.h.b16 %v1580
        %v1640 = vunpack.c.l.b16 %v1581
        %v1641 = vunpack.c.h.b16 %v1581
        %v1642 = vpack.c.b16 %v1612, %v1610
        %v1643 = vpack.c.b16 %v1613, %v1611
        %v1644 = vpack.c.b16 %v1616, %v1614
        %v1645 = vpack.c.b16 %v1617, %v1615
        %v1646 = vpack.c.b16 %v1620, %v1618
        %v1647 = vpack.c.b16 %v1621, %v1619
        %v1648 = vpack.c.b16 %v1624, %v1622
        %v1649 = vpack.c.b16 %v1625, %v1623
        %v1650 = vpack.c.b16 %v1628, %v1626
        %v1651 = vpack.c.b16 %v1629, %v1627
        %v1652 = vpack.c.b16 %v1632, %v1630
        %v1653 = vpack.c.b16 %v1633, %v1631
        %v1654 = vpack.c.b16 %v1636, %v1634
        %v1655 = vpack.c.b16 %v1637, %v1635
        %v1656 = vpack.c.b16 %v1640, %v1638
        %v1657 = vpack.c.b16 %v1641, %v1639
        %1674 = vmatprep.subr.bf16.mxu0 %v1643
        %1675 = vmatpush1.bf16.msra.mxu0 %v1642
        %1676 = vmatprep.subr.bf16.mxu0 %v1645
        %1677 = vmatpush1.bf16.msra.mxu0 %v1644
        %1678 = vmatprep.subr.bf16.mxu0 %v1647
        %1679 = vmatpush1.bf16.msra.mxu0 %v1646
        %1680 = vmatprep.subr.bf16.mxu0 %v1649
        %1681 = vmatpush1.bf16.msra.mxu0 %v1648
        %1682 = vmatprep.subr.bf16.mxu0 %v1651
        %1683 = vmatpush1.bf16.msra.mxu0 %v1650
        %1684 = vmatprep.subr.bf16.mxu0 %v1653
        %1685 = vmatpush1.bf16.msra.mxu0 %v1652
        %1686 = vmatprep.subr.bf16.mxu0 %v1655
        %1687 = vmatpush1.bf16.msra.mxu0 %v1654
        %1688 = vmatprep.subr.bf16.mxu0 %v1657
        %1689 = vmatpush1.bf16.msra.mxu0 %v1656
        %1690 = vmatprep.subr.bf16.mxu0 0
        %1691 = vmatpush1.bf16.msra.mxu0 0
        %1692 = vmatprep.subr.bf16.mxu0 0
        %1693 = vmatpush1.bf16.msra.mxu0 0
        %1694 = vmatprep.subr.bf16.mxu0 0
        %1695 = vmatpush1.bf16.msra.mxu0 0
        %1696 = vmatprep.subr.bf16.mxu0 0
        %1697 = vmatpush1.bf16.msra.mxu0 0
        %1698 = vmatprep.subr.bf16.mxu0 0
        %1699 = vmatpush1.bf16.msra.mxu0 0
        %1700 = vmatprep.subr.bf16.mxu0 0
        %1701 = vmatpush1.bf16.msra.mxu0 0
        %1702 = vmatprep.subr.bf16.mxu0 0
        %1703 = vmatpush1.bf16.msra.mxu0 0
        %1704 = vmatprep.subr.bf16.mxu0 0
        %1705 = vmatpush1.bf16.msra.mxu0 0
        %1706 = vmatprep.mubr.bf16.mxu0 0
        %1707 = vmatmul.mubr.bf16.gmra.mrb[0].mxu0 %v1550
        %v1708 = vpop.f32.mrb[0].mxu0
        %v1709 = vadd.f32 %v1587, %v1708
        %v1710 = vpop.f32.mrb[0].mxu0
        %v1711 = vadd.f32 %v1591, %v1710
        %v1712 = vpop.f32.mrb[0].mxu0
        %v1713 = vadd.f32 %v1587, %v1712
        %v1714 = vpop.f32.mrb[0].mxu0
        %v1715 = vadd.f32 %v1591, %v1714
        %1716 = vmatprep.mubr.bf16.mxu0 0
        %1717 = vmatmul.mubr.bf16.gmra.mrb[0].mxu0 %v1551
        %v1718 = vpop.f32.mrb[0].mxu0
        %v1719 = vadd.f32 %v1587, %v1718
        %v1720 = vpop.f32.mrb[0].mxu0
        %v1721 = vadd.f32 %v1591, %v1720
        %v1722 = vpop.f32.mrb[0].mxu0
        %v1723 = vadd.f32 %v1587, %v1722
        %v1724 = vpop.f32.mrb[0].mxu0
        %v1725 = vadd.f32 %v1591, %v1724
        %1726 = vmatprep.mubr.bf16.mxu0 0
        %1727 = vmatmul.mubr.bf16.gmra.mrb[0].mxu0 %v1552
        %v1728 = vpop.f32.mrb[0].mxu0
        %v1729 = vadd.f32 %v1587, %v1728
        %v1730 = vpop.f32.mrb[0].mxu0
        %v1731 = vadd.f32 %v1591, %v1730
        %v1732 = vpop.f32.mrb[0].mxu0
        %v1733 = vadd.f32 %v1587, %v1732
        %v1734 = vpop.f32.mrb[0].mxu0
        %v1735 = vadd.f32 %v1591, %v1734
        %1736 = vmatprep.mubr.bf16.mxu0 0
        %1737 = vmatmul.mubr.bf16.gmra.mrb[0].mxu0 %v1553
        %v1738 = vpop.f32.mrb[0].mxu0
        %v1739 = vadd.f32 %v1587, %v1738
        %v1740 = vpop.f32.mrb[0].mxu0
        %v1741 = vadd.f32 %v1591, %v1740
        %v1742 = vpop.f32.mrb[0].mxu0
        %v1743 = vadd.f32 %v1587, %v1742
        %v1744 = vpop.f32.mrb[0].mxu0
        %v1745 = vadd.f32 %v1591, %v1744
        %1746 = vmatprep.mubr.bf16.mxu0 0
        %1747 = vmatmul.mubr.bf16.gmra.mrb[0].mxu0 %v1554
        %v1748 = vpop.f32.mrb[0].mxu0
        %v1749 = vadd.f32 %v1587, %v1748
        %v1750 = vpop.f32.mrb[0].mxu0
        %v1751 = vadd.f32 %v1591, %v1750
        %v1752 = vpop.f32.mrb[0].mxu0
        %v1753 = vadd.f32 %v1587, %v1752
        %v1754 = vpop.f32.mrb[0].mxu0
        %v1755 = vadd.f32 %v1591, %v1754
        %1756 = vmatprep.mubr.bf16.mxu0 0
        %1757 = vmatmul.mubr.bf16.gmra.mrb[0].mxu0 %v1555
        %v1758 = vpop.f32.mrb[0].mxu0
        %v1759 = vadd.f32 %v1587, %v1758
        %v1760 = vpop.f32.mrb[0].mxu0
        %v1761 = vadd.f32 %v1591, %v1760
        %v1762 = vpop.f32.mrb[0].mxu0
        %v1763 = vadd.f32 %v1587, %v1762
        %v1764 = vpop.f32.mrb[0].mxu0
        %v1765 = vadd.f32 %v1591, %v1764
        %1766 = vmatprep.mubr.bf16.mxu0 0
        %1767 = vmatmul.mubr.bf16.gmra.mrb[0].mxu0 %v1556
        %v1768 = vpop.f32.mrb[0].mxu0
        %v1769 = vadd.f32 %v1587, %v1768
        %v1770 = vpop.f32.mrb[0].mxu0
        %v1771 = vadd.f32 %v1591, %v1770
        %v1772 = vpop.f32.mrb[0].mxu0
        %v1773 = vadd.f32 %v1587, %v1772
        %v1774 = vpop.f32.mrb[0].mxu0
        %v1775 = vadd.f32 %v1591, %v1774
        %1776 = vmatprep.mubr.bf16.mxu0 0
        %1777 = vmatmul.mubr.bf16.gmra.mrb[0].mxu0 %v1557
        %v1778 = vpop.f32.mrb[0].mxu0
        %v1779 = vadd.f32 %v1587, %v1778
        %v1780 = vpop.f32.mrb[0].mxu0
        %v1781 = vadd.f32 %v1591, %v1780
        %v1782 = vpop.f32.mrb[0].mxu0
        %v1783 = vadd.f32 %v1587, %v1782
        %v1784 = vpop.f32.mrb[0].mxu0
        %v1785 = vadd.f32 %v1591, %v1784
        %1786 = vmatprep.mubr.bf16.mxu0 0
        %1787 = vmatmul.mubr.bf16.gmra.mrb[0].mxu0 %v1558
        %v1788 = vpop.f32.mrb[0].mxu0
        %v1789 = vadd.f32 %v1587, %v1788
        %v1790 = vpop.f32.mrb[0].mxu0
        %v1791 = vadd.f32 %v1591, %v1790
        %v1792 = vpop.f32.mrb[0].mxu0
        %v1793 = vadd.f32 %v1587, %v1792
        %v1794 = vpop.f32.mrb[0].mxu0
        %v1795 = vadd.f32 %v1591, %v1794
        %1796 = vmatprep.mubr.bf16.mxu0 0
        %1797 = vmatmul.mubr.bf16.gmra.mrb[0].mxu0 %v1559
        %v1798 = vpop.f32.mrb[0].mxu0
        %v1799 = vadd.f32 %v1587, %v1798
        %v1800 = vpop.f32.mrb[0].mxu0
        %v1801 = vadd.f32 %v1591, %v1800
        %v1802 = vpop.f32.mrb[0].mxu0
        %v1803 = vadd.f32 %v1587, %v1802
        %v1804 = vpop.f32.mrb[0].mxu0
        %v1805 = vadd.f32 %v1591, %v1804
        %1806 = vmatprep.mubr.bf16.mxu0 0
        %1807 = vmatmul.mubr.bf16.gmra.mrb[0].mxu0 %v1560
        %v1808 = vpop.f32.mrb[0].mxu0
        %v1809 = vadd.f32 %v1587, %v1808
        %v1810 = vpop.f32.mrb[0].mxu0
        %v1811 = vadd.f32 %v1591, %v1810
        %v1812 = vpop.f32.mrb[0].mxu0
        %v1813 = vadd.f32 %v1587, %v1812
        %v1814 = vpop.f32.mrb[0].mxu0
        %v1815 = vadd.f32 %v1591, %v1814
        %1816 = vmatprep.mubr.bf16.mxu0 0
        %1817 = vmatmul.mubr.bf16.gmra.mrb[0].mxu0 %v1561
        %v1818 = vpop.f32.mrb[0].mxu0
        %v1819 = vadd.f32 %v1587, %v1818
        %v1820 = vpop.f32.mrb[0].mxu0
        %v1821 = vadd.f32 %v1591, %v1820
        %v1822 = vpop.f32.mrb[0].mxu0
        %v1823 = vadd.f32 %v1587, %v1822
        %v1824 = vpop.f32.mrb[0].mxu0
        %v1825 = vadd.f32 %v1591, %v1824
        %1826 = vmatprep.mubr.bf16.mxu0 0
        %1827 = vmatmul.mubr.bf16.gmra.mrb[0].mxu0 %v1562
        %v1828 = vpop.f32.mrb[0].mxu0
        %v1829 = vadd.f32 %v1587, %v1828
        %v1830 = vpop.f32.mrb[0].mxu0
        %v1831 = vadd.f32 %v1591, %v1830
        %v1832 = vpop.f32.mrb[0].mxu0
        %v1833 = vadd.f32 %v1587, %v1832
        %v1834 = vpop.f32.mrb[0].mxu0
        %v1835 = vadd.f32 %v1591, %v1834
        %1836 = vmatprep.mubr.bf16.mxu0 0
        %1837 = vmatmul.mubr.bf16.gmra.mrb[0].mxu0 %v1563
        %v1838 = vpop.f32.mrb[0].mxu0
        %v1839 = vadd.f32 %v1587, %v1838
        %v1840 = vpop.f32.mrb[0].mxu0
        %v1841 = vadd.f32 %v1591, %v1840
        %v1842 = vpop.f32.mrb[0].mxu0
        %v1843 = vadd.f32 %v1587, %v1842
        %v1844 = vpop.f32.mrb[0].mxu0
        %v1845 = vadd.f32 %v1591, %v1844
        %1846 = vmatprep.mubr.bf16.mxu0 0
        %1847 = vmatmul.mubr.bf16.gmra.mrb[0].mxu0 %v1564
        %v1848 = vpop.f32.mrb[0].mxu0
        %v1849 = vadd.f32 %v1587, %v1848
        %v1850 = vpop.f32.mrb[0].mxu0
        %v1851 = vadd.f32 %v1591, %v1850
        %v1852 = vpop.f32.mrb[0].mxu0
        %v1853 = vadd.f32 %v1587, %v1852
        %v1854 = vpop.f32.mrb[0].mxu0
        %v1855 = vadd.f32 %v1591, %v1854
        %1856 = vmatprep.mubr.bf16.mxu0 0
        %1857 = vmatmul.mubr.bf16.gmra.mrb[0].mxu0 %v1565
        %v1858 = vpop.f32.mrb[0].mxu0
        %v1859 = vadd.f32 %v1587, %v1858
        %v1860 = vpop.f32.mrb[0].mxu0
        %v1861 = vadd.f32 %v1591, %v1860
        %v1862 = vpop.f32.mrb[0].mxu0
        %v1863 = vadd.f32 %v1587, %v1862
        %v1864 = vpop.f32.mrb[0].mxu0
        %v1865 = vadd.f32 %v1591, %v1864
        %1866 = vdwg.mxu0
        %v1867 = vxor.u32 %v1709, 2147483648
        %v1868 = vxor.u32 %v1711, 2147483648
        %v1869 = vxor.u32 %v1713, 2147483648
        %v1870 = vxor.u32 %v1715, 2147483648
        %v1871 = vxor.u32 %v1719, 2147483648
        %v1872 = vxor.u32 %v1721, 2147483648
        %v1873 = vxor.u32 %v1723, 2147483648
        %v1874 = vxor.u32 %v1725, 2147483648
        %v1875 = vxor.u32 %v1729, 2147483648
        %v1876 = vxor.u32 %v1731, 2147483648
        %v1877 = vxor.u32 %v1733, 2147483648
        %v1878 = vxor.u32 %v1735, 2147483648
        %v1879 = vxor.u32 %v1739, 2147483648
        %v1880 = vxor.u32 %v1741, 2147483648
        %v1881 = vxor.u32 %v1743, 2147483648
        %v1882 = vxor.u32 %v1745, 2147483648
        %v1883 = vxor.u32 %v1749, 2147483648
        %v1884 = vxor.u32 %v1751, 2147483648
        %v1885 = vxor.u32 %v1753, 2147483648
        %v1886 = vxor.u32 %v1755, 2147483648
        %v1887 = vxor.u32 %v1759, 2147483648
        %v1888 = vxor.u32 %v1761, 2147483648
        %v1889 = vxor.u32 %v1763, 2147483648
        %v1890 = vxor.u32 %v1765, 2147483648
        %v1891 = vxor.u32 %v1769, 2147483648
        %v1892 = vxor.u32 %v1771, 2147483648
        %v1893 = vxor.u32 %v1773, 2147483648
        %v1894 = vxor.u32 %v1775, 2147483648
        %v1895 = vxor.u32 %v1779, 2147483648
        %v1896 = vxor.u32 %v1781, 2147483648
        %v1897 = vxor.u32 %v1783, 2147483648
        %v1898 = vxor.u32 %v1785, 2147483648
        %v1899 = vxor.u32 %v1789, 2147483648
        %v1900 = vxor.u32 %v1791, 2147483648
        %v1901 = vxor.u32 %v1793, 2147483648
        %v1902 = vxor.u32 %v1795, 2147483648
        %v1903 = vxor.u32 %v1799, 2147483648
        %v1904 = vxor.u32 %v1801, 2147483648
        %v1905 = vxor.u32 %v1803, 2147483648
        %v1906 = vxor.u32 %v1805, 2147483648
        %v1907 = vxor.u32 %v1809, 2147483648
        %v1908 = vxor.u32 %v1811, 2147483648
        %v1909 = vxor.u32 %v1813, 2147483648
        %v1910 = vxor.u32 %v1815, 2147483648
        %v1911 = vxor.u32 %v1819, 2147483648
        %v1912 = vxor.u32 %v1821, 2147483648
        %v1913 = vxor.u32 %v1823, 2147483648
        %v1914 = vxor.u32 %v1825, 2147483648
        %v1915 = vxor.u32 %v1829, 2147483648
        %v1916 = vxor.u32 %v1831, 2147483648
        %v1917 = vxor.u32 %v1833, 2147483648
        %v1918 = vxor.u32 %v1835, 2147483648
        %v1919 = vxor.u32 %v1839, 2147483648
        %v1920 = vxor.u32 %v1841, 2147483648
        %v1921 = vxor.u32 %v1843, 2147483648
        %v1922 = vxor.u32 %v1845, 2147483648
        %v1923 = vxor.u32 %v1849, 2147483648
        %v1924 = vxor.u32 %v1851, 2147483648
        %v1925 = vxor.u32 %v1853, 2147483648
        %v1926 = vxor.u32 %v1855, 2147483648
        %v1927 = vxor.u32 %v1859, 2147483648
        %v1928 = vxor.u32 %v1861, 2147483648
        %v1929 = vxor.u32 %v1863, 2147483648
        %v1930 = vxor.u32 %v1865, 2147483648
        %v1931 = vmul.f32 %v1867, 1.442695
        %v1932 = vpow.pop %v1931
        %v1933 = vmul.f32 %v1868, 1.442695
        %v1934 = vpow.pop %v1933
        %v1935 = vmul.f32 %v1869, 1.442695
        %v1936 = vpow.pop %v1935
        %v1937 = vmul.f32 %v1870, 1.442695
        %v1938 = vpow.pop %v1937
        %v1939 = vmul.f32 %v1871, 1.442695
        %v1940 = vpow.pop %v1939
        %v1941 = vmul.f32 %v1872, 1.442695
        %v1942 = vpow.pop %v1941
        %v1943 = vmul.f32 %v1873, 1.442695
        %v1944 = vpow.pop %v1943
        %v1945 = vmul.f32 %v1874, 1.442695
        %v1946 = vpow.pop %v1945
        %v1947 = vmul.f32 %v1875, 1.442695
        %v1948 = vpow.pop %v1947
        %v1949 = vmul.f32 %v1876, 1.442695
        %v1950 = vpow.pop %v1949
        %v1951 = vmul.f32 %v1877, 1.442695
        %v1952 = vpow.pop %v1951
        %v1953 = vmul.f32 %v1878, 1.442695
        %v1954 = vpow.pop %v1953
        %v1955 = vmul.f32 %v1879, 1.442695
        %v1956 = vpow.pop %v1955
        %v1957 = vmul.f32 %v1880, 1.442695
        %v1958 = vpow.pop %v1957
        %v1959 = vmul.f32 %v1881, 1.442695
        %v1960 = vpow.pop %v1959
        %v1961 = vmul.f32 %v1882, 1.442695
        %v1962 = vpow.pop %v1961
        %v1963 = vmul.f32 %v1883, 1.442695
        %v1964 = vpow.pop %v1963
        %v1965 = vmul.f32 %v1884, 1.442695
        %v1966 = vpow.pop %v1965
        %v1967 = vmul.f32 %v1885, 1.442695
        %v1968 = vpow.pop %v1967
        %v1969 = vmul.f32 %v1886, 1.442695
        %v1970 = vpow.pop %v1969
        %v1971 = vmul.f32 %v1887, 1.442695
        %v1972 = vpow.pop %v1971
        %v1973 = vmul.f32 %v1888, 1.442695
        %v1974 = vpow.pop %v1973
        %v1975 = vmul.f32 %v1889, 1.442695
        %v1976 = vpow.pop %v1975
        %v1977 = vmul.f32 %v1890, 1.442695
        %v1978 = vpow.pop %v1977
        %v1979 = vmul.f32 %v1891, 1.442695
        %v1980 = vpow.pop %v1979
        %v1981 = vmul.f32 %v1892, 1.442695
        %v1982 = vpow.pop %v1981
        %v1983 = vmul.f32 %v1893, 1.442695
        %v1984 = vpow.pop %v1983
        %v1985 = vmul.f32 %v1894, 1.442695
        %v1986 = vpow.pop %v1985
        %v1987 = vmul.f32 %v1895, 1.442695
        %v1988 = vpow.pop %v1987
        %v1989 = vmul.f32 %v1896, 1.442695
        %v1990 = vpow.pop %v1989
        %v1991 = vmul.f32 %v1897, 1.442695
        %v1992 = vpow.pop %v1991
        %v1993 = vmul.f32 %v1898, 1.442695
        %v1994 = vpow.pop %v1993
        %v1995 = vmul.f32 %v1899, 1.442695
        %v1996 = vpow.pop %v1995
        %v1997 = vmul.f32 %v1900, 1.442695
        %v1998 = vpow.pop %v1997
        %v1999 = vmul.f32 %v1901, 1.442695
        %v2000 = vpow.pop %v1999
        %v2001 = vmul.f32 %v1902, 1.442695
        %v2002 = vpow.pop %v2001
        %v2003 = vmul.f32 %v1903, 1.442695
        %v2004 = vpow.pop %v2003
        %v2005 = vmul.f32 %v1904, 1.442695
        %v2006 = vpow.pop %v2005
        %v2007 = vmul.f32 %v1905, 1.442695
        %v2008 = vpow.pop %v2007
        %v2009 = vmul.f32 %v1906, 1.442695
        %v2010 = vpow.pop %v2009
        %v2011 = vmul.f32 %v1907, 1.442695
        %v2012 = vpow.pop %v2011
        %v2013 = vmul.f32 %v1908, 1.442695
        %v2014 = vpow.pop %v2013
        %v2015 = vmul.f32 %v1909, 1.442695
        %v2016 = vpow.pop %v2015
        %v2017 = vmul.f32 %v1910, 1.442695
        %v2018 = vpow.pop %v2017
        %v2019 = vmul.f32 %v1911, 1.442695
        %v2020 = vpow.pop %v2019
        %v2021 = vmul.f32 %v1912, 1.442695
        %v2022 = vpow.pop %v2021
        %v2023 = vmul.f32 %v1913, 1.442695
        %v2024 = vpow.pop %v2023
        %v2025 = vmul.f32 %v1914, 1.442695
        %v2026 = vpow.pop %v2025
        %v2027 = vmul.f32 %v1915, 1.442695
        %v2028 = vpow.pop %v2027
        %v2029 = vmul.f32 %v1916, 1.442695
        %v2030 = vpow.pop %v2029
        %v2031 = vmul.f32 %v1917, 1.442695
        %v2032 = vpow.pop %v2031
        %v2033 = vmul.f32 %v1918, 1.442695
        %v2034 = vpow.pop %v2033
        %v2035 = vmul.f32 %v1919, 1.442695
        %v2036 = vpow.pop %v2035
        %v2037 = vmul.f32 %v1920, 1.442695
        %v2038 = vpow.pop %v2037
        %v2039 = vmul.f32 %v1921, 1.442695
        %v2040 = vpow.pop %v2039
        %v2041 = vmul.f32 %v1922, 1.442695
        %v2042 = vpow.pop %v2041
        %v2043 = vmul.f32 %v1923, 1.442695
        %v2044 = vpow.pop %v2043
        %v2045 = vmul.f32 %v1924, 1.442695
        %v2046 = vpow.pop %v2045
        %v2047 = vmul.f32 %v1925, 1.442695
        %v2048 = vpow.pop %v2047
        %v2049 = vmul.f32 %v1926, 1.442695
        %v2050 = vpow.pop %v2049
        %v2051 = vmul.f32 %v1927, 1.442695
        %v2052 = vpow.pop %v2051
        %v2053 = vmul.f32 %v1928, 1.442695
        %v2054 = vpow.pop %v2053
        %v2055 = vmul.f32 %v1929, 1.442695
        %v2056 = vpow.pop %v2055
        %v2057 = vmul.f32 %v1930, 1.442695
        %v2058 = vpow.pop %v2057
        %v2059 = vadd.f32 %v1932, 1.0
        %v2060 = vadd.f32 %v1934, 1.0
        %v2061 = vadd.f32 %v1936, 1.0
        %v2062 = vadd.f32 %v1938, 1.0
        %v2063 = vadd.f32 %v1940, 1.0
        %v2064 = vadd.f32 %v1942, 1.0
        %v2065 = vadd.f32 %v1944, 1.0
        %v2066 = vadd.f32 %v1946, 1.0
        %v2067 = vadd.f32 %v1948, 1.0
        %v2068 = vadd.f32 %v1950, 1.0
        %v2069 = vadd.f32 %v1952, 1.0
        %v2070 = vadd.f32 %v1954, 1.0
        %v2071 = vadd.f32 %v1956, 1.0
        %v2072 = vadd.f32 %v1958, 1.0
        %v2073 = vadd.f32 %v1960, 1.0
        %v2074 = vadd.f32 %v1962, 1.0
        %v2075 = vadd.f32 %v1964, 1.0
        %v2076 = vadd.f32 %v1966, 1.0
        %v2077 = vadd.f32 %v1968, 1.0
        %v2078 = vadd.f32 %v1970, 1.0
        %v2079 = vadd.f32 %v1972, 1.0
        %v2080 = vadd.f32 %v1974, 1.0
        %v2081 = vadd.f32 %v1976, 1.0
        %v2082 = vadd.f32 %v1978, 1.0
        %v2083 = vadd.f32 %v1980, 1.0
        %v2084 = vadd.f32 %v1982, 1.0
        %v2085 = vadd.f32 %v1984, 1.0
        %v2086 = vadd.f32 %v1986, 1.0
        %v2087 = vadd.f32 %v1988, 1.0
        %v2088 = vadd.f32 %v1990, 1.0
        %v2089 = vadd.f32 %v1992, 1.0
        %v2090 = vadd.f32 %v1994, 1.0
        %v2091 = vadd.f32 %v1996, 1.0
        %v2092 = vadd.f32 %v1998, 1.0
        %v2093 = vadd.f32 %v2000, 1.0
        %v2094 = vadd.f32 %v2002, 1.0
        %v2095 = vadd.f32 %v2004, 1.0
        %v2096 = vadd.f32 %v2006, 1.0
        %v2097 = vadd.f32 %v2008, 1.0
        %v2098 = vadd.f32 %v2010, 1.0
        %v2099 = vadd.f32 %v2012, 1.0
        %v2100 = vadd.f32 %v2014, 1.0
        %v2101 = vadd.f32 %v2016, 1.0
        %v2102 = vadd.f32 %v2018, 1.0
        %v2103 = vadd.f32 %v2020, 1.0
        %v2104 = vadd.f32 %v2022, 1.0
        %v2105 = vadd.f32 %v2024, 1.0
        %v2106 = vadd.f32 %v2026, 1.0
        %v2107 = vadd.f32 %v2028, 1.0
        %v2108 = vadd.f32 %v2030, 1.0
        %v2109 = vadd.f32 %v2032, 1.0
        %v2110 = vadd.f32 %v2034, 1.0
        %v2111 = vadd.f32 %v2036, 1.0
        %v2112 = vadd.f32 %v2038, 1.0
        %v2113 = vadd.f32 %v2040, 1.0
        %v2114 = vadd.f32 %v2042, 1.0
        %v2115 = vadd.f32 %v2044, 1.0
        %v2116 = vadd.f32 %v2046, 1.0
        %v2117 = vadd.f32 %v2048, 1.0
        %v2118 = vadd.f32 %v2050, 1.0
        %v2119 = vadd.f32 %v2052, 1.0
        %v2120 = vadd.f32 %v2054, 1.0
        %v2121 = vadd.f32 %v2056, 1.0
        %v2122 = vadd.f32 %v2058, 1.0
        %v2123 = vrcp.pop %v2059
        %v2124 = vmul.f32 1.0, %v2123
        %v2125 = vrcp.pop %v2060
        %v2126 = vmul.f32 1.0, %v2125
        %v2127 = vrcp.pop %v2061
        %v2128 = vmul.f32 1.0, %v2127
        %v2129 = vrcp.pop %v2062
        %v2130 = vmul.f32 1.0, %v2129
        %v2131 = vrcp.pop %v2063
        %v2132 = vmul.f32 1.0, %v2131
        %v2133 = vrcp.pop %v2064
        %v2134 = vmul.f32 1.0, %v2133
        %v2135 = vrcp.pop %v2065
        %v2136 = vmul.f32 1.0, %v2135
        %v2137 = vrcp.pop %v2066
        %v2138 = vmul.f32 1.0, %v2137
        %v2139 = vrcp.pop %v2067
        %v2140 = vmul.f32 1.0, %v2139
        %v2141 = vrcp.pop %v2068
        %v2142 = vmul.f32 1.0, %v2141
        %v2143 = vrcp.pop %v2069
        %v2144 = vmul.f32 1.0, %v2143
        %v2145 = vrcp.pop %v2070
        %v2146 = vmul.f32 1.0, %v2145
        %v2147 = vrcp.pop %v2071
        %v2148 = vmul.f32 1.0, %v2147
        %v2149 = vrcp.pop %v2072
        %v2150 = vmul.f32 1.0, %v2149
        %v2151 = vrcp.pop %v2073
        %v2152 = vmul.f32 1.0, %v2151
        %v2153 = vrcp.pop %v2074
        %v2154 = vmul.f32 1.0, %v2153
        %v2155 = vrcp.pop %v2075
        %v2156 = vmul.f32 1.0, %v2155
        %v2157 = vrcp.pop %v2076
        %v2158 = vmul.f32 1.0, %v2157
        %v2159 = vrcp.pop %v2077
        %v2160 = vmul.f32 1.0, %v2159
        %v2161 = vrcp.pop %v2078
        %v2162 = vmul.f32 1.0, %v2161
        %v2163 = vrcp.pop %v2079
        %v2164 = vmul.f32 1.0, %v2163
        %v2165 = vrcp.pop %v2080
        %v2166 = vmul.f32 1.0, %v2165
        %v2167 = vrcp.pop %v2081
        %v2168 = vmul.f32 1.0, %v2167
        %v2169 = vrcp.pop %v2082
        %v2170 = vmul.f32 1.0, %v2169
        %v2171 = vrcp.pop %v2083
        %v2172 = vmul.f32 1.0, %v2171
        %v2173 = vrcp.pop %v2084
        %v2174 = vmul.f32 1.0, %v2173
        %v2175 = vrcp.pop %v2085
        %v2176 = vmul.f32 1.0, %v2175
        %v2177 = vrcp.pop %v2086
        %v2178 = vmul.f32 1.0, %v2177
        %v2179 = vrcp.pop %v2087
        %v2180 = vmul.f32 1.0, %v2179
        %v2181 = vrcp.pop %v2088
        %v2182 = vmul.f32 1.0, %v2181
        %v2183 = vrcp.pop %v2089
        %v2184 = vmul.f32 1.0, %v2183
        %v2185 = vrcp.pop %v2090
        %v2186 = vmul.f32 1.0, %v2185
        %v2187 = vrcp.pop %v2091
        %v2188 = vmul.f32 1.0, %v2187
        %v2189 = vrcp.pop %v2092
        %v2190 = vmul.f32 1.0, %v2189
        %v2191 = vrcp.pop %v2093
        %v2192 = vmul.f32 1.0, %v2191
        %v2193 = vrcp.pop %v2094
        %v2194 = vmul.f32 1.0, %v2193
        %v2195 = vrcp.pop %v2095
        %v2196 = vmul.f32 1.0, %v2195
        %v2197 = vrcp.pop %v2096
        %v2198 = vmul.f32 1.0, %v2197
        %v2199 = vrcp.pop %v2097
        %v2200 = vmul.f32 1.0, %v2199
        %v2201 = vrcp.pop %v2098
        %v2202 = vmul.f32 1.0, %v2201
        %v2203 = vrcp.pop %v2099
        %v2204 = vmul.f32 1.0, %v2203
        %v2205 = vrcp.pop %v2100
        %v2206 = vmul.f32 1.0, %v2205
        %v2207 = vrcp.pop %v2101
        %v2208 = vmul.f32 1.0, %v2207
        %v2209 = vrcp.pop %v2102
        %v2210 = vmul.f32 1.0, %v2209
        %v2211 = vrcp.pop %v2103
        %v2212 = vmul.f32 1.0, %v2211
        %v2213 = vrcp.pop %v2104
        %v2214 = vmul.f32 1.0, %v2213
        %v2215 = vrcp.pop %v2105
        %v2216 = vmul.f32 1.0, %v2215
        %v2217 = vrcp.pop %v2106
        %v2218 = vmul.f32 1.0, %v2217
        %v2219 = vrcp.pop %v2107
        %v2220 = vmul.f32 1.0, %v2219
        %v2221 = vrcp.pop %v2108
        %v2222 = vmul.f32 1.0, %v2221
        %v2223 = vrcp.pop %v2109
        %v2224 = vmul.f32 1.0, %v2223
        %v2225 = vrcp.pop %v2110
        %v2226 = vmul.f32 1.0, %v2225
        %v2227 = vrcp.pop %v2111
        %v2228 = vmul.f32 1.0, %v2227
        %v2229 = vrcp.pop %v2112
        %v2230 = vmul.f32 1.0, %v2229
        %v2231 = vrcp.pop %v2113
        %v2232 = vmul.f32 1.0, %v2231
        %v2233 = vrcp.pop %v2114
        %v2234 = vmul.f32 1.0, %v2233
        %v2235 = vrcp.pop %v2115
        %v2236 = vmul.f32 1.0, %v2235
        %v2237 = vrcp.pop %v2116
        %v2238 = vmul.f32 1.0, %v2237
        %v2239 = vrcp.pop %v2117
        %v2240 = vmul.f32 1.0, %v2239
        %v2241 = vrcp.pop %v2118
        %v2242 = vmul.f32 1.0, %v2241
        %v2243 = vrcp.pop %v2119
        %v2244 = vmul.f32 1.0, %v2243
        %v2245 = vrcp.pop %v2120
        %v2246 = vmul.f32 1.0, %v2245
        %v2247 = vrcp.pop %v2121
        %v2248 = vmul.f32 1.0, %v2247
        %v2249 = vrcp.pop %v2122
        %v2250 = vmul.f32 1.0, %v2249
        %v2251 = vpack.c.bf16 %v2128, %v2124
        %v2252 = vpack.c.bf16 %v2130, %v2126
        %v2253 = vpack.c.bf16 %v2136, %v2132
        %v2254 = vpack.c.bf16 %v2138, %v2134
        %v2255 = vpack.c.bf16 %v2144, %v2140
        %v2256 = vpack.c.bf16 %v2146, %v2142
        %v2257 = vpack.c.bf16 %v2152, %v2148
        %v2258 = vpack.c.bf16 %v2154, %v2150
        %v2259 = vpack.c.bf16 %v2160, %v2156
        %v2260 = vpack.c.bf16 %v2162, %v2158
        %v2261 = vpack.c.bf16 %v2168, %v2164
        %v2262 = vpack.c.bf16 %v2170, %v2166
        %v2263 = vpack.c.bf16 %v2176, %v2172
        %v2264 = vpack.c.bf16 %v2178, %v2174
        %v2265 = vpack.c.bf16 %v2184, %v2180
        %v2266 = vpack.c.bf16 %v2186, %v2182
        %v2267 = vpack.c.bf16 %v2192, %v2188
        %v2268 = vpack.c.bf16 %v2194, %v2190
        %v2269 = vpack.c.bf16 %v2200, %v2196
        %v2270 = vpack.c.bf16 %v2202, %v2198
        %v2271 = vpack.c.bf16 %v2208, %v2204
        %v2272 = vpack.c.bf16 %v2210, %v2206
        %v2273 = vpack.c.bf16 %v2216, %v2212
        %v2274 = vpack.c.bf16 %v2218, %v2214
        %v2275 = vpack.c.bf16 %v2224, %v2220
        %v2276 = vpack.c.bf16 %v2226, %v2222
        %v2277 = vpack.c.bf16 %v2232, %v2228
        %v2278 = vpack.c.bf16 %v2234, %v2230
        %v2279 = vpack.c.bf16 %v2240, %v2236
        %v2280 = vpack.c.bf16 %v2242, %v2238
        %v2281 = vpack.c.bf16 %v2248, %v2244
        %v2282 = vpack.c.bf16 %v2250, %v2246
        %v2315 = vunpack.c.l.b16 %v2251
        %v2316 = vunpack.c.l.b16 %v2252
        %v2317 = vunpack.c.h.b16 %v2251
        %v2318 = vunpack.c.h.b16 %v2252
        %v2319 = vunpack.c.l.b16 %v2253
        %v2320 = vunpack.c.l.b16 %v2254
        %v2321 = vunpack.c.h.b16 %v2253
        %v2322 = vunpack.c.h.b16 %v2254
        %v2323 = vunpack.c.l.b16 %v2255
        %v2324 = vunpack.c.l.b16 %v2256
        %v2325 = vunpack.c.h.b16 %v2255
        %v2326 = vunpack.c.h.b16 %v2256
        %v2327 = vunpack.c.l.b16 %v2257
        %v2328 = vunpack.c.l.b16 %v2258
        %v2329 = vunpack.c.h.b16 %v2257
        %v2330 = vunpack.c.h.b16 %v2258
        %v2331 = vunpack.c.l.b16 %v2259
        %v2332 = vunpack.c.l.b16 %v2260
        %v2333 = vunpack.c.h.b16 %v2259
        %v2334 = vunpack.c.h.b16 %v2260
        %v2335 = vunpack.c.l.b16 %v2261
        %v2336 = vunpack.c.l.b16 %v2262
        %v2337 = vunpack.c.h.b16 %v2261
        %v2338 = vunpack.c.h.b16 %v2262
        %v2339 = vunpack.c.l.b16 %v2263
        %v2340 = vunpack.c.l.b16 %v2264
        %v2341 = vunpack.c.h.b16 %v2263
        %v2342 = vunpack.c.h.b16 %v2264
        %v2343 = vunpack.c.l.b16 %v2265
        %v2344 = vunpack.c.l.b16 %v2266
        %v2345 = vunpack.c.h.b16 %v2265
        %v2346 = vunpack.c.h.b16 %v2266
        %v2347 = vunpack.c.l.b16 %v2267
        %v2348 = vunpack.c.l.b16 %v2268
        %v2349 = vunpack.c.h.b16 %v2267
        %v2350 = vunpack.c.h.b16 %v2268
        %v2351 = vunpack.c.l.b16 %v2269
        %v2352 = vunpack.c.l.b16 %v2270
        %v2353 = vunpack.c.h.b16 %v2269
        %v2354 = vunpack.c.h.b16 %v2270
        %v2355 = vunpack.c.l.b16 %v2271
        %v2356 = vunpack.c.l.b16 %v2272
        %v2357 = vunpack.c.h.b16 %v2271
        %v2358 = vunpack.c.h.b16 %v2272
        %v2359 = vunpack.c.l.b16 %v2273
        %v2360 = vunpack.c.l.b16 %v2274
        %v2361 = vunpack.c.h.b16 %v2273
        %v2362 = vunpack.c.h.b16 %v2274
        %v2363 = vunpack.c.l.b16 %v2275
        %v2364 = vunpack.c.l.b16 %v2276
        %v2365 = vunpack.c.h.b16 %v2275
        %v2366 = vunpack.c.h.b16 %v2276
        %v2367 = vunpack.c.l.b16 %v2277
        %v2368 = vunpack.c.l.b16 %v2278
        %v2369 = vunpack.c.h.b16 %v2277
        %v2370 = vunpack.c.h.b16 %v2278
        %v2371 = vunpack.c.l.b16 %v2279
        %v2372 = vunpack.c.l.b16 %v2280
        %v2373 = vunpack.c.h.b16 %v2279
        %v2374 = vunpack.c.h.b16 %v2280
        %v2375 = vunpack.c.l.b16 %v2281
        %v2376 = vunpack.c.l.b16 %v2282
        %v2377 = vunpack.c.h.b16 %v2281
        %v2378 = vunpack.c.h.b16 %v2282
        %v2379 = vpack.c.b16 %v2316, %v2315
        %v2380 = vpack.c.b16 %v2318, %v2317
        %v2381 = vpack.c.b16 %v2320, %v2319
        %v2382 = vpack.c.b16 %v2322, %v2321
        %v2383 = vpack.c.b16 %v2324, %v2323
        %v2384 = vpack.c.b16 %v2326, %v2325
        %v2385 = vpack.c.b16 %v2328, %v2327
        %v2386 = vpack.c.b16 %v2330, %v2329
        %v2387 = vpack.c.b16 %v2332, %v2331
        %v2388 = vpack.c.b16 %v2334, %v2333
        %v2389 = vpack.c.b16 %v2336, %v2335
        %v2390 = vpack.c.b16 %v2338, %v2337
        %v2391 = vpack.c.b16 %v2340, %v2339
        %v2392 = vpack.c.b16 %v2342, %v2341
        %v2393 = vpack.c.b16 %v2344, %v2343
        %v2394 = vpack.c.b16 %v2346, %v2345
        %v2395 = vpack.c.b16 %v2348, %v2347
        %v2396 = vpack.c.b16 %v2350, %v2349
        %v2397 = vpack.c.b16 %v2352, %v2351
        %v2398 = vpack.c.b16 %v2354, %v2353
        %v2399 = vpack.c.b16 %v2356, %v2355
        %v2400 = vpack.c.b16 %v2358, %v2357
        %v2401 = vpack.c.b16 %v2360, %v2359
        %v2402 = vpack.c.b16 %v2362, %v2361
        %v2403 = vpack.c.b16 %v2364, %v2363
        %v2404 = vpack.c.b16 %v2366, %v2365
        %v2405 = vpack.c.b16 %v2368, %v2367
        %v2406 = vpack.c.b16 %v2370, %v2369
        %v2407 = vpack.c.b16 %v2372, %v2371
        %v2408 = vpack.c.b16 %v2374, %v2373
        %v2409 = vpack.c.b16 %v2376, %v2375
        %v2410 = vpack.c.b16 %v2378, %v2377
        %2443 = vst [vmem:[%s444] sm:$0xff] %v2379
        %2444 = vst [vmem:[%s444 + $0x8] sm:$0xff] %v2380
        %2445 = vst [vmem:[%s444 + $0x10] sm:$0xff] %v2381
        %2446 = vst [vmem:[%s444 + $0x18] sm:$0xff] %v2382
        %2447 = vst [vmem:[%s444 + $0x20] sm:$0xff] %v2383
        %2448 = vst [vmem:[%s444 + $0x28] sm:$0xff] %v2384
        %2449 = vst [vmem:[%s444 + $0x30] sm:$0xff] %v2385
        %2450 = vst [vmem:[%s444 + $0x38] sm:$0xff] %v2386
        %2451 = vst [vmem:[%s444 + $0x40] sm:$0xff] %v2387
        %2452 = vst [vmem:[%s444 + $0x48] sm:$0xff] %v2388
        %2453 = vst [vmem:[%s444 + $0x50] sm:$0xff] %v2389
        %2454 = vst [vmem:[%s444 + $0x58] sm:$0xff] %v2390
        %2455 = vst [vmem:[%s444 + $0x60] sm:$0xff] %v2391
        %2456 = vst [vmem:[%s444 + $0x68] sm:$0xff] %v2392
        %2457 = vst [vmem:[%s444 + $0x70] sm:$0xff] %v2393
        %2458 = vst [vmem:[%s444 + $0x78] sm:$0xff] %v2394
        %2459 = vst [vmem:[%s444 + $0x80] sm:$0xff] %v2395
        %2460 = vst [vmem:[%s444 + $0x88] sm:$0xff] %v2396
        %2461 = vst [vmem:[%s444 + $0x90] sm:$0xff] %v2397
        %2462 = vst [vmem:[%s444 + $0x98] sm:$0xff] %v2398
        %2463 = vst [vmem:[%s444 + $0xa0] sm:$0xff] %v2399
        %2464 = vst [vmem:[%s444 + $0xa8] sm:$0xff] %v2400
        %2465 = vst [vmem:[%s444 + $0xb0] sm:$0xff] %v2401
        %2466 = vst [vmem:[%s444 + $0xb8] sm:$0xff] %v2402
        %2467 = vst [vmem:[%s444 + $0xc0] sm:$0xff] %v2403
        %2468 = vst [vmem:[%s444 + $0xc8] sm:$0xff] %v2404
        %2469 = vst [vmem:[%s444 + $0xd0] sm:$0xff] %v2405
        %2470 = vst [vmem:[%s444 + $0xd8] sm:$0xff] %v2406
        %2471 = vst [vmem:[%s444 + $0xe0] sm:$0xff] %v2407
        %2472 = vst [vmem:[%s444 + $0xe8] sm:$0xff] %v2408
        %2473 = vst [vmem:[%s444 + $0xf0] sm:$0xff] %v2409
        %2474 = vst [vmem:[%s444 + $0xf8] sm:$0xff] %v2410
        %s2475 = smul.u32 32, %s30
        %p2476 = scmp.lt.s32.totalorder %s2475, 63
        %s2477 = scalar_select %p2476, %s2475, 63
        %s2478 = smul.addr %s2477, 4
        %s2479 = scalar_lea.vmem %s9, %s2478
        %s2480 = sand.u32 %s258, 1
        %s2481 = scalar_lea.sflag [#allocation4], %s2480
        %s2482 = sand.u32 %s258, 1
        %s2483 = smul.addr %s2482, 256
        %s2484 = scalar_lea.vmem [#allocation11], %s2483
        // Predicated region
        $region77: #{autoencoder_forward.1} parent=55 // pred_check
          %p2485 = pneg %p242
        $region78: #{autoencoder_forward.1} parent=55 // pred_check_branch
          %2487 = sbr.rel (%p2485) target = $region80
        $region79: #{autoencoder_forward.1} parent=55 // pred_region
          %s2488 = smul.u32 32, %s30
        $region80: #{autoencoder_forward.1} parent=55 // pred_fallthru
          _
        // Predicated region
        $region81: #{autoencoder_forward.1} parent=55 // pred_check
          %p2489 = pneg %p268
        $region82: #{autoencoder_forward.1} parent=55 // pred_check_branch
          %2491 = sbr.rel (%p2489) target = $region84
        $region83: #{autoencoder_forward.1} parent=55 // pred_region
          %s2492 = smul.u32 32, %s30
          %s2494 = ssub.s32 4096, 4096
          %2495 = vsyncadd %s2481, %s2494
          %s2496 = smul.addr %s2492, 2
          %s2497 = smul.addr %s2496, 64
          %s2498 = scalar_lea.hbm %s10, %s2497
          %s2499 = sshll.u32 %s2484, 4
          %s2500 = int_to_ptr.vmem [resolvable:$true] %s2499
          %2505 = dma.vmem_to_hbm [thread:$0]  %s2500, 4096, %s2498, %s2481, 128, 128, 8
        $region84: #{autoencoder_forward.1} parent=55 // pred_fallthru
          _
      $region56: #{autoencoder_forward.1} parent=5 // pred_fallthru
        _
      %p2506 = scmp.le.s32.totalorder 2, %s25
      // Predicated region
      $region85: #{autoencoder_forward.1} parent=5 // pred_check
        %p2507 = pneg %p2506
      $region86: #{autoencoder_forward.1} parent=5 // pred_check_branch
        %2509 = sbr.rel (%p2507) target = $region88
      $region87: #{autoencoder_forward.1} parent=5 // pred_region
        %s2510 = ssub.s32 %s25, 2
        // Predicated region
        $region89: #{autoencoder_forward.1} parent=87 // pred_check
          %p2511 = pneg %p248
        $region90: #{autoencoder_forward.1} parent=87 // pred_check_branch
          %2513 = sbr.rel (%p2511) target = $region92
        $region91: #{autoencoder_forward.1} parent=87 // pred_region
          %s2514 = smul.u32 32, %s31
          %p2515 = scmp.lt.s32.totalorder %s2514, 63
          %s2516 = scalar_select %p2515, %s2514, 63
          %s2517 = smul.addr %s2516, 4
          %s2518 = scalar_lea.vmem %s9, %s2517
        $region92: #{autoencoder_forward.1} parent=87 // pred_fallthru
          _
        // Predicated region
        $region93: #{autoencoder_forward.1} parent=87 // pred_check
          %p2519 = pneg %p274
        $region94: #{autoencoder_forward.1} parent=87 // pred_check_branch
          %2521 = sbr.rel (%p2519) target = $region96
        $region95: #{autoencoder_forward.1} parent=87 // pred_region
          %s2522 = sand.u32 %s259, 1
          %s2523 = scalar_lea.sflag [#allocation4], %s2522
          %s2524 = sand.u32 %s259, 1
          %s2525 = smul.addr %s2524, 256
          %s2526 = scalar_lea.vmem [#allocation11], %s2525
          %2527 = dma.done %s2523, 4096
        $region96: #{autoencoder_forward.1} parent=87 // pred_fallthru
          _
      $region88: #{autoencoder_forward.1} parent=5 // pred_fallthru
        _
    $region6: #{autoencoder_forward.1} parent=1 // loop_footer
      %s29 = sadd.s32 1, %s25
    $region7: #{autoencoder_forward.1} parent=1 // loop_footer_branch
      %24 = sbr.rel target = $region3
    $region8: #{autoencoder_forward.1} parent=1 // loop_exit
      _
    %2528 = vsyncpa [#allocation3], 1
    %s2529 = scalar_lea.sflag [#allocation3], 1
    %2530 = vsyncpa %s2529, 1
    %2531 = vsyncpa [#allocation6], 1
    %2532 = vsyncpa [#allocation9], 1
    %2533 = vsyncpa [#allocation4], 1
    %s2534 = scalar_lea.sflag [#allocation4], 1
    %2535 = vsyncpa %s2534, 1

</llo_original>
